<compile_context>
chip_gen: v7x
topology: tpu7x:2x2x1
jax: 0.10.0
libtpu: 0.0.40
codegen_flags: <defaults>
</compile_context>

<pallas_src>
import functools

import jax
import jax.numpy as jnp
from jax import lax
from jax.experimental import pallas as pl
from jax.experimental.pallas import tpu as pltpu


# ---------------------------------------------------------------------------
# Helpers
# ---------------------------------------------------------------------------
def _round_up(x, m):
    return (x + m - 1) // m * m


def _vmem_limit_bytes():
    """Generation-gated VMEM budget (~3/4 of physical):
    v5e/v6e (128 MiB) -> 96 MiB, v7x (64 MiB per TensorCore) -> 48 MiB."""
    try:
        cap = int(getattr(pltpu.get_tpu_info(), "vmem_capacity_bytes",
                          64 * 1024 * 1024))
    except Exception:
        cap = 64 * 1024 * 1024
    return min(cap * 3 // 4, 112 * 1024 * 1024)


def _choose_tq(nq_p, per_q_bytes, budget_bytes):
    """Largest multiple-of-8 divisor of nq_p whose per-tile working set fits the
    budget; keeps >= 2 grid steps when nq_p allows (v7x has 2 TensorCores)."""
    cap = (budget_bytes // max(per_q_bytes, 1)) // 8 * 8
    cap = max(8, min(nq_p, cap))
    if nq_p >= 16:
        cap = min(cap, max(8, (nq_p // 2) // 8 * 8))
    tq = 8
    for cand in range(8, cap + 1, 8):
        if nq_p % cand == 0:
            tq = cand
    return tq


# ---------------------------------------------------------------------------
# Kernel
# ---------------------------------------------------------------------------
def _make_kernel(nk_valid, fused):
    """One grid step = `tq` queries.  Per query q (fused, stays in vregs):
         c = W1d @ dist[q]            (D, nkp)  MXU, nk on lanes
         h = relu(c + kproj + a[q])   (D, nkp)  VPU
         s = W2 @ h + b2              (1, nkp)
       fused variant additionally does a row softmax (padded key lanes clamped)
       and, after the loop, out_tile = prob @ value^T."""

    def kernel(d_ref, a_ref, kproj_ref, w1d_ref, w2_ref, b2_ref, *rest):
        if fused:
            vT_ref, out_ref, scores_ref, p_scr = rest
        else:
            (scores_ref,) = rest

        tq = d_ref.shape[0]
        nkp = d_ref.shape[2]

        def body(t, carry):
            slab = d_ref[t]                                         # (D, nkp)
            c = jnp.dot(w1d_ref[...], slab,
                        preferred_element_type=jnp.float32)         # (D, nkp)
            h = jnp.maximum(c + kproj_ref[...] + a_ref[t], 0.0)     # a_ref[t]: (D, 1)
            s = jnp.dot(w2_ref[...], h,
                        preferred_element_type=jnp.float32) + b2_ref[0]   # (1, nkp)
            scores_ref[pl.ds(t, 1), :] = s
            if fused:
                if nkp > nk_valid:       # clamp padded key lanes out of the softmax
                    lane = lax.broadcasted_iota(jnp.int32, (1, nkp), 1)
                    s = jnp.where(lane < nk_valid, s, -1e30)
                m = jnp.max(s, axis=-1, keepdims=True)
                e = jnp.exp(s - m)
                p = e * pl.reciprocal(jnp.sum(e, axis=-1, keepdims=True),
                                      approx=True)
                p_scr[pl.ds(t, 1), :] = p
            return carry

        lax.fori_loop(0, tq, body, 0, unroll=bool(tq <= 32))

        if fused:
            out_ref[...] = jnp.dot(p_scr[...], vT_ref[...],
                                   preferred_element_type=jnp.float32
                                   ).astype(out_ref.dtype)

    return kernel


# ---------------------------------------------------------------------------
# pallas_call runner
# ---------------------------------------------------------------------------
@functools.partial(jax.jit,
                   static_argnames=("nk_valid", "tq", "fused", "vmem_limit"))
def _run(d3, a3, kproj, w1d, w2row, b2r, vT, *, nk_valid, tq, fused, vmem_limit):
    nq_p, dd, nkp = d3.shape
    grid = (nq_p // tq,)

    in_specs = [
        # dist slabs: dominant DMA.  If xprof shows exposed DMA, add
        # pipeline_mode=pl.Buffered(3) here (watch VMEM budget on v7x).
        pl.BlockSpec((tq, dd, nkp), lambda i: (i, 0, 0)),
        pl.BlockSpec((tq, dd, 1), lambda i: (i, 0, 0)),     # per-q proj column (f32)
        pl.BlockSpec((dd, nkp), lambda i: (0, 0)),          # key projection (resident)
        pl.BlockSpec((dd, dd), lambda i: (0, 0)),           # W1d
        pl.BlockSpec((1, dd), lambda i: (0, 0)),            # W2 row
        pl.BlockSpec(memory_space=pltpu.MemorySpace.SMEM),  # b2 scalar
    ]
    args = [d3, a3, kproj, w1d, w2row, b2r]

    itemsize = jnp.dtype(d3.dtype).itemsize
    flops = 2 * nq_p * dd * dd * nkp + 2 * nq_p * nkp * dd
    transcendentals = 0
    bytes_accessed = (d3.size * itemsize + a3.size * 4 + kproj.size * 4 +
                      w1d.size * itemsize + w2row.size * 4 + nq_p * nkp * 4)

    if fused:
        in_specs.append(pl.BlockSpec((nkp, dd), lambda i: (0, 0)))  # value^T (resident)
        args.append(vT)
        out_shape = (jax.ShapeDtypeStruct((nq_p, dd), jnp.float32),
                     jax.ShapeDtypeStruct((nq_p, nkp), jnp.float32))
        out_specs = (pl.BlockSpec((tq, dd), lambda i: (i, 0)),
                     pl.BlockSpec((tq, nkp), lambda i: (i, 0)))
        scratch = [pltpu.VMEM((tq, nkp), jnp.float32)]
        flops += 2 * nq_p * nkp * dd
        transcendentals = nq_p * nkp
        bytes_accessed += vT.size * 4 + nq_p * dd * 4
    else:
        out_shape = jax.ShapeDtypeStruct((nq_p, nkp), jnp.float32)
        out_specs = pl.BlockSpec((tq, nkp), lambda i: (i, 0))
        scratch = []

    return pl.pallas_call(
        _make_kernel(nk_valid, fused),
        grid=grid,
        in_specs=in_specs,
        out_specs=out_specs,
        out_shape=out_shape,
        scratch_shapes=scratch,
        compiler_params=pltpu.CompilerParams(
            dimension_semantics=("parallel",),
            vmem_limit_bytes=vmem_limit),
        cost_estimate=pl.CostEstimate(flops=int(flops),
                                      transcendentals=int(transcendentals),
                                      bytes_accessed=int(bytes_accessed)),
    )(*args)


# ---------------------------------------------------------------------------
# PyTorch-layout wrapper
# ---------------------------------------------------------------------------
def mlp_attention_forward(query, key, value, dist, mask, params,
                          matmul_dtype=jnp.bfloat16):
    """query: (1, D, nq)   key/value: (1, D, nk)
    dist : (1, D, nq*nk) PyTorch NCW layout, or pre-arranged (nq, D, nk)
           (preferred: skips the wrapper-side HBM transpose of the largest array).
    mask : None, or boolean (1, nq, nk) / (nq, nk)
    returns (output (1, D, nq), scores (1, nq, nk)) like the nn.Module default path."""
    D = query.shape[1]
    nq, nk = query.shape[-1], key.shape[-1]

    W1 = jnp.asarray(params["W1"], jnp.float32)      # (D, 3D)
    b1 = jnp.asarray(params["b1"], jnp.float32)      # (D,)
    W2 = jnp.asarray(params["W2"], jnp.float32)      # (1, D)
    b2 = jnp.asarray(params["b2"], jnp.float32)      # (1,)

    q2 = jnp.transpose(query[0]).astype(jnp.float32)            # (nq, D)
    k_nc = key[0].astype(jnp.float32)                           # (D, nk)

    # Hoisted loop-invariant / per-q tiny projections (stay f32).
    a = q2 @ jnp.transpose(W1[:, :D]) + b1[None, :]             # (nq, D) = W1q q + b1
    kproj = W1[:, D:2 * D] @ k_nc                               # (D, nk) = W1k k

    # dist -> (nq, D, nk) channel slabs (nk becomes the lane axis in the kernel).
    if dist.ndim == 3 and dist.shape == (1, D, nq * nk):
        d3 = jnp.transpose(dist[0].reshape(D, nq, nk), (1, 0, 2))
    elif dist.shape == (nq, D, nk):
        d3 = dist
    else:
        raise ValueError(f"unexpected dist shape {dist.shape}")

    # Padding: nk -> multiple of 128 (lane-dense stores), nq -> multiple of 8.
    nkp = _round_up(nk, 128)
    nq_p = _round_up(nq, 8)

    vmem_limit = _vmem_limit_bytes()
    itemsize = jnp.dtype(matmul_dtype).itemsize
    per_q_bytes = nkp * (2 * D * itemsize + 16)   # dist dbuf + scores dbuf + prob scratch
    tq = _choose_tq(nq_p, per_q_bytes, vmem_limit // 4)

    d3p = jnp.pad(d3.astype(matmul_dtype),
                  ((0, nq_p - nq), (0, 0), (0, nkp - nk)))                 # (nq_p, D, nkp)
    a3 = jnp.pad(a, ((0, nq_p - nq), (0, 0)))[:, :, None]                  # (nq_p, D, 1)
    kproj_p = jnp.pad(kproj, ((0, 0), (0, nkp - nk)))                      # (D, nkp)
    w1d = W1[:, 2 * D:].astype(matmul_dtype)                               # (D, D)
    w2row = jnp.reshape(W2, (1, D)).astype(jnp.float32)                    # (1, D)
    b2r = jnp.reshape(b2, (1,)).astype(jnp.float32)
    vT = jnp.pad(jnp.transpose(value[0]).astype(jnp.float32),
                 ((0, nkp - nk), (0, 0)))                                  # (nkp, D)

    if mask is None:
        out_p, scores_p = _run(d3p, a3, kproj_p, w1d, w2row, b2r, vT,
                               nk_valid=nk, tq=tq, fused=True,
                               vmem_limit=vmem_limit)
        scores = scores_p[:nq, :nk]
        out = jnp.transpose(out_p[:nq, :])                                 # (D, nq)
        return out[None], scores[None]

    if isinstance(mask, float):
        # TODO(synk): float-mask rescaling branch (torch.median-based scale) not implemented.
        raise NotImplementedError("float mask path not implemented")

    # Boolean mask: kernel emits raw scores; the global-min offset, softmax and
    # prob @ value are applied exactly (true global min, PyTorch semantics) here.
    scores_p = _run(d3p, a3, kproj_p, w1d, w2row, b2r, None,
                    nk_valid=nk, tq=tq, fused=False, vmem_limit=vmem_limit)
    s = scores_p[:nq, :nk]
    m = jnp.asarray(mask, jnp.float32).reshape(nq, nk)
    s = s + (jnp.min(s) - 20.0) * (1.0 - m)
    prob = jax.nn.softmax(s, axis=-1)
    out = jnp.einsum('nm,dm->dn', prob, value[0].astype(jnp.float32))
    return out[None], s[None]


# ---------------------------------------------------------------------------
# Pure-JAX mirror of the PyTorch forward for verification
# ---------------------------------------------------------------------------
def _reference(query, key, value, dist, mask, params):
    D = query.shape[1]
    nq, nk = query.shape[-1], key.shape[-1]
    q_rep = jnp.repeat(query[0][:, :, None], nk, axis=2).reshape(D, nq * nk)
    k_rep = jnp.repeat(key[0][:, None, :], nq, axis=1).reshape(D, nq * nk)
    cat = jnp.concatenate([q_rep, k_rep, dist[0]], axis=0)                  # (3D, nq*nk)
    h = jnp.maximum(params["W1"] @ cat + params["b1"][:, None], 0.0)
    s = (params["W2"] @ h + params["b2"][:, None]).reshape(nq, nk)
    if mask is not None:
        s = s + (jnp.min(s) - 20.0) * (1.0 - jnp.asarray(mask, jnp.float32).reshape(nq, nk))
    prob = jax.nn.softmax(s, axis=-1)
    out = jnp.einsum('nm,dm->dn', prob, value[0])
    return out[None], s[None]


if __name__ == "__main__":
    desc_dim = 32
    nq, nk = 10, 20     # deliberately not multiples of 8 / 128: exercises padding + 2-tile grid

    rng = jax.random.PRNGKey(0)
    ks = jax.random.split(rng, 8)

    query = jax.random.normal(ks[0], (1, desc_dim, nq), jnp.float32)
    keyt = jax.random.normal(ks[1], (1, desc_dim, nk), jnp.float32)
    value = jax.random.normal(ks[2], (1, desc_dim, nk), jnp.float32)
    dist = jax.random.normal(ks[3], (1, desc_dim, nq * nk), jnp.float32)

    # Parameter shapes from MLP([3D, D, 1]) with 1x1 convs + bias.
    params = {
        "W1": 0.1 * jax.random.normal(ks[4], (desc_dim, 3 * desc_dim), jnp.float32),
        "b1": 0.1 * jax.random.normal(ks[5], (desc_dim,), jnp.float32),
        "W2": 0.1 * jax.random.normal(ks[6], (1, desc_dim), jnp.float32),
        "b2": 0.1 * jax.random.normal(ks[7], (1,), jnp.float32),
    }

    ref_out, ref_scores = _reference(query, keyt, value, dist, None, params)

    # --- f32, no mask (fused in-kernel softmax + prob@value), tight tolerance -------
    out, scores = mlp_attention_forward(query, keyt, value, dist, None, params,
                                        matmul_dtype=jnp.float32)
    out, scores = jax.block_until_ready(out), jax.block_until_ready(scores)
    assert jnp.allclose(scores, ref_scores, atol=1e-4, rtol=1e-4), "f32 scores mismatch"
    assert jnp.allclose(out, ref_out, atol=5e-3, rtol=5e-3), "f32 output mismatch"

    # --- bf16 default (dist / W1d in bf16, post-matmul math f32), looser tolerance --
    out_bf, scores_bf = mlp_attention_forward(query, keyt, value, dist, None, params)
    out_bf, scores_bf = jax.block_until_ready(out_bf), jax.block_until_ready(scores_bf)
    assert jnp.allclose(scores_bf, ref_scores, atol=2e-2, rtol=2e-2), "bf16 scores mismatch"
    assert jnp.allclose(out_bf, ref_out, atol=5e-2, rtol=5e-2), "bf16 output mismatch"

    # --- boolean-mask path (global min applied exactly outside the kernel), f32 -----
    mask = ((jnp.arange(nq)[:, None] + jnp.arange(nk)[None, :]) % 4) != 0   # (nq, nk) bool
    ref_out_m, ref_scores_m = _reference(query, keyt, value, dist, mask, params)
    out_m, scores_m = mlp_attention_forward(query, keyt, value, dist, mask, params,
                                            matmul_dtype=jnp.float32)
    out_m, scores_m = jax.block_until_ready(out_m), jax.block_until_ready(scores_m)
    assert jnp.allclose(scores_m, ref_scores_m, atol=1e-4, rtol=1e-4), "masked scores mismatch"
    assert jnp.allclose(out_m, ref_out_m, atol=1e-4, rtol=1e-4), "masked output mismatch"

    print("KERNEL_OK")
</pallas_src>

<mosaic_0001>
module attributes {stable_mosaic.version = 11 : i64} {
  func.func @kernel(%arg0: i32, %arg1: memref<8x32x128xf32, #tpu.memory_space<vmem>>, %arg2: memref<8x32x1xf32, #tpu.memory_space<vmem>>, %arg3: memref<32x128xf32, #tpu.memory_space<vmem>>, %arg4: memref<32x32xf32, #tpu.memory_space<vmem>>, %arg5: memref<1x32xf32, #tpu.memory_space<vmem>>, %arg6: memref<1xf32, #tpu.memory_space<smem>>, %arg7: memref<128x32xf32, #tpu.memory_space<vmem>>, %arg8: memref<8x32xf32, #tpu.memory_space<vmem>>, %arg9: memref<8x128xf32, #tpu.memory_space<vmem>>, %arg10: memref<8x128xf32, #tpu.memory_space<vmem>>) attributes {dimension_semantics = [#tpu.dimension_semantics<parallel>], iteration_bounds = array<i64: 2>, scalar_prefetch = 0 : i64, scratch_operands = 1 : i64, tpu.core_type = #tpu.core_type<tc>, window_params = [{transform_indices = @transform_0, window_bounds = array<i64: 8, 32, 128>}, {transform_indices = @transform_1, window_bounds = array<i64: 8, 32, 1>}, {pipeline_mode = #tpu.pipeline_mode<synchronous>, transform_indices = @transform_2, window_bounds = array<i64: 32, 128>}, {pipeline_mode = #tpu.pipeline_mode<synchronous>, transform_indices = @transform_3, window_bounds = array<i64: 32, 32>}, {pipeline_mode = #tpu.pipeline_mode<synchronous>, transform_indices = @transform_4, window_bounds = array<i64: 1, 32>}, {transform_indices = @transform_5, window_bounds = array<i64: 1>}, {pipeline_mode = #tpu.pipeline_mode<synchronous>, transform_indices = @transform_6, window_bounds = array<i64: 128, 32>}, {transform_indices = @transform_7, window_bounds = array<i64: 8, 32>}, {transform_indices = @transform_8, window_bounds = array<i64: 8, 128>}]} {
    %c0_i32 = arith.constant 0 : i32
    %0 = arith.index_cast %c0_i32 : i32 to index
    %c0 = arith.constant 0 : index
    %c0_0 = arith.constant 0 : index
    %1 = vector.load %arg1[%0, %c0, %c0_0] : memref<8x32x128xf32, #tpu.memory_space<vmem>>, vector<1x32x128xf32>
    %2 = vector.shape_cast %1 : vector<1x32x128xf32> to vector<32x128xf32>
    %c0_1 = arith.constant 0 : index
    %c0_2 = arith.constant 0 : index
    %3 = vector.load %arg4[%c0_1, %c0_2] : memref<32x32xf32, #tpu.memory_space<vmem>>, vector<32x32xf32>
    %cst = arith.constant dense<0.000000e+00> : vector<32x128xf32>
    %4 = tpu.matmul %3, %2, %cst {dimension_numbers = #tpu.dot_dimension_numbers<[1], [0], [0], [1], [0, 0, 1, 1], [], []>} : vector<32x32xf32>, vector<32x128xf32>, vector<32x128xf32> -> vector<32x128xf32>
    %c0_3 = arith.constant 0 : index
    %c0_4 = arith.constant 0 : index
    %5 = vector.load %arg3[%c0_3, %c0_4] : memref<32x128xf32, #tpu.memory_space<vmem>>, vector<32x128xf32>
    %6 = arith.addf %4, %5 : vector<32x128xf32>
    %7 = arith.index_cast %c0_i32 : i32 to index
    %c0_5 = arith.constant 0 : index
    %c0_6 = arith.constant 0 : index
    %8 = vector.load %arg2[%7, %c0_5, %c0_6] : memref<8x32x1xf32, #tpu.memory_space<vmem>>, vector<1x32x1xf32>
    %9 = vector.shape_cast %8 : vector<1x32x1xf32> to vector<32x1xf32>
    %10 = vector.broadcast %9 : vector<32x1xf32> to vector<32x128xf32>
    %11 = arith.addf %6, %10 : vector<32x128xf32>
    %cst_7 = arith.constant 0.000000e+00 : f32
    %12 = vector.broadcast %cst_7 : f32 to vector<32x128xf32>
    %13 = arith.maximumf %11, %12 : vector<32x128xf32>
    %c0_8 = arith.constant 0 : index
    %c0_9 = arith.constant 0 : index
    %14 = vector.load %arg5[%c0_8, %c0_9] : memref<1x32xf32, #tpu.memory_space<vmem>>, vector<1x32xf32>
    %cst_10 = arith.constant dense<0.000000e+00> : vector<1x128xf32>
    %15 = tpu.matmul %14, %13, %cst_10 {dimension_numbers = #tpu.dot_dimension_numbers<[1], [0], [0], [1], [0, 0, 1, 1], [], []>} : vector<1x32xf32>, vector<32x128xf32>, vector<1x128xf32> -> vector<1x128xf32>
    %c0_11 = arith.constant 0 : index
    %16 = memref.load %arg6[%c0_11] : memref<1xf32, #tpu.memory_space<smem>>
    %17 = vector.broadcast %16 : f32 to vector<1x128xf32>
    %18 = arith.addf %15, %17 : vector<1x128xf32>
    %19 = arith.index_cast %c0_i32 : i32 to index
    %c0_12 = arith.constant 0 : index
    %20 = vector.load %arg9[%19, %c0_12] : memref<8x128xf32, #tpu.memory_space<vmem>>, vector<1x128xf32>
    tpu.vector_store %arg9[%19, %c0_12], %18 {strides = array<i32>} : memref<8x128xf32, #tpu.memory_space<vmem>>, vector<1x128xf32>,
    %21 = tpu.iota {dimensions = array<i32: 1>} : vector<1x128xi32>
    %c20_i32 = arith.constant 20 : i32
    %22 = vector.broadcast %c20_i32 : i32 to vector<1x128xi32>
    %23 = arith.cmpi slt, %21, %22 : vector<1x128xi32>
    %cst_13 = arith.constant -1.000000e+30 : f32
    %24 = vector.broadcast %cst_13 : f32 to vector<1x128xf32>
    %25 = arith.select %23, %18, %24 : vector<1x128xi1>, vector<1x128xf32>
    %cst_14 = arith.constant dense<0xFF800000> : vector<1xf32>
    %26 = vector.multi_reduction <maximumf>, %25, %cst_14 [1] : vector<1x128xf32> to vector<1xf32>
    %27 = vector.shape_cast %26 : vector<1xf32> to vector<1x1xf32>
    %28 = vector.broadcast %27 : vector<1x1xf32> to vector<1x128xf32>
    %29 = arith.subf %25, %28 : vector<1x128xf32>
    %30 = math.exp %29 : vector<1x128xf32>
    %cst_15 = arith.constant dense<0.000000e+00> : vector<1xf32>
    %31 = vector.multi_reduction <add>, %30, %cst_15 [1] : vector<1x128xf32> to vector<1xf32>
    %32 = vector.shape_cast %31 : vector<1xf32> to vector<1x1xf32>
    %33 = tpu.reciprocal %32 {approx = true} : vector<1x1xf32> -> vector<1x1xf32>
    %34 = vector.broadcast %33 : vector<1x1xf32> to vector<1x128xf32>
    %35 = arith.mulf %30, %34 : vector<1x128xf32>
    %36 = arith.index_cast %c0_i32 : i32 to index
    %c0_16 = arith.constant 0 : index
    %37 = vector.load %arg10[%36, %c0_16] : memref<8x128xf32, #tpu.memory_space<vmem>>, vector<1x128xf32>
    tpu.vector_store %arg10[%36, %c0_16], %35 {strides = array<i32>} : memref<8x128xf32, #tpu.memory_space<vmem>>, vector<1x128xf32>,
    %c1_i32 = arith.constant 1 : i32
    %38 = arith.index_cast %c1_i32 : i32 to index
    %c0_17 = arith.constant 0 : index
    %c0_18 = arith.constant 0 : index
    %39 = vector.load %arg1[%38, %c0_17, %c0_18] : memref<8x32x128xf32, #tpu.memory_space<vmem>>, vector<1x32x128xf32>
    %40 = vector.shape_cast %39 : vector<1x32x128xf32> to vector<32x128xf32>
    %c0_19 = arith.constant 0 : index
    %c0_20 = arith.constant 0 : index
    %41 = vector.load %arg4[%c0_19, %c0_20] : memref<32x32xf32, #tpu.memory_space<vmem>>, vector<32x32xf32>
    %cst_21 = arith.constant dense<0.000000e+00> : vector<32x128xf32>
    %42 = tpu.matmul %41, %40, %cst_21 {dimension_numbers = #tpu.dot_dimension_numbers<[1], [0], [0], [1], [0, 0, 1, 1], [], []>} : vector<32x32xf32>, vector<32x128xf32>, vector<32x128xf32> -> vector<32x128xf32>
    %c0_22 = arith.constant 0 : index
    %c0_23 = arith.constant 0 : index
    %43 = vector.load %arg3[%c0_22, %c0_23] : memref<32x128xf32, #tpu.memory_space<vmem>>, vector<32x128xf32>
    %44 = arith.addf %42, %43 : vector<32x128xf32>
    %45 = arith.index_cast %c1_i32 : i32 to index
    %c0_24 = arith.constant 0 : index
    %c0_25 = arith.constant 0 : index
    %46 = vector.load %arg2[%45, %c0_24, %c0_25] : memref<8x32x1xf32, #tpu.memory_space<vmem>>, vector<1x32x1xf32>
    %47 = vector.shape_cast %46 : vector<1x32x1xf32> to vector<32x1xf32>
    %48 = vector.broadcast %47 : vector<32x1xf32> to vector<32x128xf32>
    %49 = arith.addf %44, %48 : vector<32x128xf32>
    %cst_26 = arith.constant 0.000000e+00 : f32
    %50 = vector.broadcast %cst_26 : f32 to vector<32x128xf32>
    %51 = arith.maximumf %49, %50 : vector<32x128xf32>
    %c0_27 = arith.constant 0 : index
    %c0_28 = arith.constant 0 : index
    %52 = vector.load %arg5[%c0_27, %c0_28] : memref<1x32xf32, #tpu.memory_space<vmem>>, vector<1x32xf32>
    %cst_29 = arith.constant dense<0.000000e+00> : vector<1x128xf32>
    %53 = tpu.matmul %52, %51, %cst_29 {dimension_numbers = #tpu.dot_dimension_numbers<[1], [0], [0], [1], [0, 0, 1, 1], [], []>} : vector<1x32xf32>, vector<32x128xf32>, vector<1x128xf32> -> vector<1x128xf32>
    %c0_30 = arith.constant 0 : index
    %54 = memref.load %arg6[%c0_30] : memref<1xf32, #tpu.memory_space<smem>>
    %55 = vector.broadcast %54 : f32 to vector<1x128xf32>
    %56 = arith.addf %53, %55 : vector<1x128xf32>
    %57 = arith.index_cast %c1_i32 : i32 to index
    %c0_31 = arith.constant 0 : index
    %58 = vector.load %arg9[%57, %c0_31] : memref<8x128xf32, #tpu.memory_space<vmem>>, vector<1x128xf32>
    tpu.vector_store %arg9[%57, %c0_31], %56 {strides = array<i32>} : memref<8x128xf32, #tpu.memory_space<vmem>>, vector<1x128xf32>,
    %59 = tpu.iota {dimensions = array<i32: 1>} : vector<1x128xi32>
    %c20_i32_32 = arith.constant 20 : i32
    %60 = vector.broadcast %c20_i32_32 : i32 to vector<1x128xi32>
    %61 = arith.cmpi slt, %59, %60 : vector<1x128xi32>
    %cst_33 = arith.constant -1.000000e+30 : f32
    %62 = vector.broadcast %cst_33 : f32 to vector<1x128xf32>
    %63 = arith.select %61, %56, %62 : vector<1x128xi1>, vector<1x128xf32>
    %cst_34 = arith.constant dense<0xFF800000> : vector<1xf32>
    %64 = vector.multi_reduction <maximumf>, %63, %cst_34 [1] : vector<1x128xf32> to vector<1xf32>
    %65 = vector.shape_cast %64 : vector<1xf32> to vector<1x1xf32>
    %66 = vector.broadcast %65 : vector<1x1xf32> to vector<1x128xf32>
    %67 = arith.subf %63, %66 : vector<1x128xf32>
    %68 = math.exp %67 : vector<1x128xf32>
    %cst_35 = arith.constant dense<0.000000e+00> : vector<1xf32>
    %69 = vector.multi_reduction <add>, %68, %cst_35 [1] : vector<1x128xf32> to vector<1xf32>
    %70 = vector.shape_cast %69 : vector<1xf32> to vector<1x1xf32>
    %71 = tpu.reciprocal %70 {approx = true} : vector<1x1xf32> -> vector<1x1xf32>
    %72 = vector.broadcast %71 : vector<1x1xf32> to vector<1x128xf32>
    %73 = arith.mulf %68, %72 : vector<1x128xf32>
    %74 = arith.index_cast %c1_i32 : i32 to index
    %c0_36 = arith.constant 0 : index
    %75 = vector.load %arg10[%74, %c0_36] : memref<8x128xf32, #tpu.memory_space<vmem>>, vector<1x128xf32>
    tpu.vector_store %arg10[%74, %c0_36], %73 {strides = array<i32>} : memref<8x128xf32, #tpu.memory_space<vmem>>, vector<1x128xf32>,
    %c2_i32 = arith.constant 2 : i32
    %76 = arith.index_cast %c2_i32 : i32 to index
    %c0_37 = arith.constant 0 : index
    %c0_38 = arith.constant 0 : index
    %77 = vector.load %arg1[%76, %c0_37, %c0_38] : memref<8x32x128xf32, #tpu.memory_space<vmem>>, vector<1x32x128xf32>
    %78 = vector.shape_cast %77 : vector<1x32x128xf32> to vector<32x128xf32>
    %c0_39 = arith.constant 0 : index
    %c0_40 = arith.constant 0 : index
    %79 = vector.load %arg4[%c0_39, %c0_40] : memref<32x32xf32, #tpu.memory_space<vmem>>, vector<32x32xf32>
    %cst_41 = arith.constant dense<0.000000e+00> : vector<32x128xf32>
    %80 = tpu.matmul %79, %78, %cst_41 {dimension_numbers = #tpu.dot_dimension_numbers<[1], [0], [0], [1], [0, 0, 1, 1], [], []>} : vector<32x32xf32>, vector<32x128xf32>, vector<32x128xf32> -> vector<32x128xf32>
    %c0_42 = arith.constant 0 : index
    %c0_43 = arith.constant 0 : index
    %81 = vector.load %arg3[%c0_42, %c0_43] : memref<32x128xf32, #tpu.memory_space<vmem>>, vector<32x128xf32>
    %82 = arith.addf %80, %81 : vector<32x128xf32>
    %83 = arith.index_cast %c2_i32 : i32 to index
    %c0_44 = arith.constant 0 : index
    %c0_45 = arith.constant 0 : index
    %84 = vector.load %arg2[%83, %c0_44, %c0_45] : memref<8x32x1xf32, #tpu.memory_space<vmem>>, vector<1x32x1xf32>
    %85 = vector.shape_cast %84 : vector<1x32x1xf32> to vector<32x1xf32>
    %86 = vector.broadcast %85 : vector<32x1xf32> to vector<32x128xf32>
    %87 = arith.addf %82, %86 : vector<32x128xf32>
    %cst_46 = arith.constant 0.000000e+00 : f32
    %88 = vector.broadcast %cst_46 : f32 to vector<32x128xf32>
    %89 = arith.maximumf %87, %88 : vector<32x128xf32>
    %c0_47 = arith.constant 0 : index
    %c0_48 = arith.constant 0 : index
    %90 = vector.load %arg5[%c0_47, %c0_48] : memref<1x32xf32, #tpu.memory_space<vmem>>, vector<1x32xf32>
    %cst_49 = arith.constant dense<0.000000e+00> : vector<1x128xf32>
    %91 = tpu.matmul %90, %89, %cst_49 {dimension_numbers = #tpu.dot_dimension_numbers<[1], [0], [0], [1], [0, 0, 1, 1], [], []>} : vector<1x32xf32>, vector<32x128xf32>, vector<1x128xf32> -> vector<1x128xf32>
    %c0_50 = arith.constant 0 : index
    %92 = memref.load %arg6[%c0_50] : memref<1xf32, #tpu.memory_space<smem>>
    %93 = vector.broadcast %92 : f32 to vector<1x128xf32>
    %94 = arith.addf %91, %93 : vector<1x128xf32>
    %95 = arith.index_cast %c2_i32 : i32 to index
    %c0_51 = arith.constant 0 : index
    %96 = vector.load %arg9[%95, %c0_51] : memref<8x128xf32, #tpu.memory_space<vmem>>, vector<1x128xf32>
    tpu.vector_store %arg9[%95, %c0_51], %94 {strides = array<i32>} : memref<8x128xf32, #tpu.memory_space<vmem>>, vector<1x128xf32>,
    %97 = tpu.iota {dimensions = array<i32: 1>} : vector<1x128xi32>
    %c20_i32_52 = arith.constant 20 : i32
    %98 = vector.broadcast %c20_i32_52 : i32 to vector<1x128xi32>
    %99 = arith.cmpi slt, %97, %98 : vector<1x128xi32>
    %cst_53 = arith.constant -1.000000e+30 : f32
    %100 = vector.broadcast %cst_53 : f32 to vector<1x128xf32>
    %101 = arith.select %99, %94, %100 : vector<1x128xi1>, vector<1x128xf32>
    %cst_54 = arith.constant dense<0xFF800000> : vector<1xf32>
    %102 = vector.multi_reduction <maximumf>, %101, %cst_54 [1] : vector<1x128xf32> to vector<1xf32>
    %103 = vector.shape_cast %102 : vector<1xf32> to vector<1x1xf32>
    %104 = vector.broadcast %103 : vector<1x1xf32> to vector<1x128xf32>
    %105 = arith.subf %101, %104 : vector<1x128xf32>
    %106 = math.exp %105 : vector<1x128xf32>
    %cst_55 = arith.constant dense<0.000000e+00> : vector<1xf32>
    %107 = vector.multi_reduction <add>, %106, %cst_55 [1] : vector<1x128xf32> to vector<1xf32>
    %108 = vector.shape_cast %107 : vector<1xf32> to vector<1x1xf32>
    %109 = tpu.reciprocal %108 {approx = true} : vector<1x1xf32> -> vector<1x1xf32>
    %110 = vector.broadcast %109 : vector<1x1xf32> to vector<1x128xf32>
    %111 = arith.mulf %106, %110 : vector<1x128xf32>
    %112 = arith.index_cast %c2_i32 : i32 to index
    %c0_56 = arith.constant 0 : index
    %113 = vector.load %arg10[%112, %c0_56] : memref<8x128xf32, #tpu.memory_space<vmem>>, vector<1x128xf32>
    tpu.vector_store %arg10[%112, %c0_56], %111 {strides = array<i32>} : memref<8x128xf32, #tpu.memory_space<vmem>>, vector<1x128xf32>,
    %c3_i32 = arith.constant 3 : i32
    %114 = arith.index_cast %c3_i32 : i32 to index
    %c0_57 = arith.constant 0 : index
    %c0_58 = arith.constant 0 : index
    %115 = vector.load %arg1[%114, %c0_57, %c0_58] : memref<8x32x128xf32, #tpu.memory_space<vmem>>, vector<1x32x128xf32>
    %116 = vector.shape_cast %115 : vector<1x32x128xf32> to vector<32x128xf32>
    %c0_59 = arith.constant 0 : index
    %c0_60 = arith.constant 0 : index
    %117 = vector.load %arg4[%c0_59, %c0_60] : memref<32x32xf32, #tpu.memory_space<vmem>>, vector<32x32xf32>
    %cst_61 = arith.constant dense<0.000000e+00> : vector<32x128xf32>
    %118 = tpu.matmul %117, %116, %cst_61 {dimension_numbers = #tpu.dot_dimension_numbers<[1], [0], [0], [1], [0, 0, 1, 1], [], []>} : vector<32x32xf32>, vector<32x128xf32>, vector<32x128xf32> -> vector<32x128xf32>
    %c0_62 = arith.constant 0 : index
    %c0_63 = arith.constant 0 : index
    %119 = vector.load %arg3[%c0_62, %c0_63] : memref<32x128xf32, #tpu.memory_space<vmem>>, vector<32x128xf32>
    %120 = arith.addf %118, %119 : vector<32x128xf32>
    %121 = arith.index_cast %c3_i32 : i32 to index
    %c0_64 = arith.constant 0 : index
    %c0_65 = arith.constant 0 : index
    %122 = vector.load %arg2[%121, %c0_64, %c0_65] : memref<8x32x1xf32, #tpu.memory_space<vmem>>, vector<1x32x1xf32>
    %123 = vector.shape_cast %122 : vector<1x32x1xf32> to vector<32x1xf32>
    %124 = vector.broadcast %123 : vector<32x1xf32> to vector<32x128xf32>
    %125 = arith.addf %120, %124 : vector<32x128xf32>
    %cst_66 = arith.constant 0.000000e+00 : f32
    %126 = vector.broadcast %cst_66 : f32 to vector<32x128xf32>
    %127 = arith.maximumf %125, %126 : vector<32x128xf32>
    %c0_67 = arith.constant 0 : index
    %c0_68 = arith.constant 0 : index
    %128 = vector.load %arg5[%c0_67, %c0_68] : memref<1x32xf32, #tpu.memory_space<vmem>>, vector<1x32xf32>
    %cst_69 = arith.constant dense<0.000000e+00> : vector<1x128xf32>
    %129 = tpu.matmul %128, %127, %cst_69 {dimension_numbers = #tpu.dot_dimension_numbers<[1], [0], [0], [1], [0, 0, 1, 1], [], []>} : vector<1x32xf32>, vector<32x128xf32>, vector<1x128xf32> -> vector<1x128xf32>
    %c0_70 = arith.constant 0 : index
    %130 = memref.load %arg6[%c0_70] : memref<1xf32, #tpu.memory_space<smem>>
    %131 = vector.broadcast %130 : f32 to vector<1x128xf32>
    %132 = arith.addf %129, %131 : vector<1x128xf32>
    %133 = arith.index_cast %c3_i32 : i32 to index
    %c0_71 = arith.constant 0 : index
    %134 = vector.load %arg9[%133, %c0_71] : memref<8x128xf32, #tpu.memory_space<vmem>>, vector<1x128xf32>
    tpu.vector_store %arg9[%133, %c0_71], %132 {strides = array<i32>} : memref<8x128xf32, #tpu.memory_space<vmem>>, vector<1x128xf32>,
    %135 = tpu.iota {dimensions = array<i32: 1>} : vector<1x128xi32>
    %c20_i32_72 = arith.constant 20 : i32
    %136 = vector.broadcast %c20_i32_72 : i32 to vector<1x128xi32>
    %137 = arith.cmpi slt, %135, %136 : vector<1x128xi32>
    %cst_73 = arith.constant -1.000000e+30 : f32
    %138 = vector.broadcast %cst_73 : f32 to vector<1x128xf32>
    %139 = arith.select %137, %132, %138 : vector<1x128xi1>, vector<1x128xf32>
    %cst_74 = arith.constant dense<0xFF800000> : vector<1xf32>
    %140 = vector.multi_reduction <maximumf>, %139, %cst_74 [1] : vector<1x128xf32> to vector<1xf32>
    %141 = vector.shape_cast %140 : vector<1xf32> to vector<1x1xf32>
    %142 = vector.broadcast %141 : vector<1x1xf32> to vector<1x128xf32>
    %143 = arith.subf %139, %142 : vector<1x128xf32>
    %144 = math.exp %143 : vector<1x128xf32>
    %cst_75 = arith.constant dense<0.000000e+00> : vector<1xf32>
    %145 = vector.multi_reduction <add>, %144, %cst_75 [1] : vector<1x128xf32> to vector<1xf32>
    %146 = vector.shape_cast %145 : vector<1xf32> to vector<1x1xf32>
    %147 = tpu.reciprocal %146 {approx = true} : vector<1x1xf32> -> vector<1x1xf32>
    %148 = vector.broadcast %147 : vector<1x1xf32> to vector<1x128xf32>
    %149 = arith.mulf %144, %148 : vector<1x128xf32>
    %150 = arith.index_cast %c3_i32 : i32 to index
    %c0_76 = arith.constant 0 : index
    %151 = vector.load %arg10[%150, %c0_76] : memref<8x128xf32, #tpu.memory_space<vmem>>, vector<1x128xf32>
    tpu.vector_store %arg10[%150, %c0_76], %149 {strides = array<i32>} : memref<8x128xf32, #tpu.memory_space<vmem>>, vector<1x128xf32>,
    %c4_i32 = arith.constant 4 : i32
    %152 = arith.index_cast %c4_i32 : i32 to index
    %c0_77 = arith.constant 0 : index
    %c0_78 = arith.constant 0 : index
    %153 = vector.load %arg1[%152, %c0_77, %c0_78] : memref<8x32x128xf32, #tpu.memory_space<vmem>>, vector<1x32x128xf32>
    %154 = vector.shape_cast %153 : vector<1x32x128xf32> to vector<32x128xf32>
    %c0_79 = arith.constant 0 : index
    %c0_80 = arith.constant 0 : index
    %155 = vector.load %arg4[%c0_79, %c0_80] : memref<32x32xf32, #tpu.memory_space<vmem>>, vector<32x32xf32>
    %cst_81 = arith.constant dense<0.000000e+00> : vector<32x128xf32>
    %156 = tpu.matmul %155, %154, %cst_81 {dimension_numbers = #tpu.dot_dimension_numbers<[1], [0], [0], [1], [0, 0, 1, 1], [], []>} : vector<32x32xf32>, vector<32x128xf32>, vector<32x128xf32> -> vector<32x128xf32>
    %c0_82 = arith.constant 0 : index
    %c0_83 = arith.constant 0 : index
    %157 = vector.load %arg3[%c0_82, %c0_83] : memref<32x128xf32, #tpu.memory_space<vmem>>, vector<32x128xf32>
    %158 = arith.addf %156, %157 : vector<32x128xf32>
    %159 = arith.index_cast %c4_i32 : i32 to index
    %c0_84 = arith.constant 0 : index
    %c0_85 = arith.constant 0 : index
    %160 = vector.load %arg2[%159, %c0_84, %c0_85] : memref<8x32x1xf32, #tpu.memory_space<vmem>>, vector<1x32x1xf32>
    %161 = vector.shape_cast %160 : vector<1x32x1xf32> to vector<32x1xf32>
    %162 = vector.broadcast %161 : vector<32x1xf32> to vector<32x128xf32>
    %163 = arith.addf %158, %162 : vector<32x128xf32>
    %cst_86 = arith.constant 0.000000e+00 : f32
    %164 = vector.broadcast %cst_86 : f32 to vector<32x128xf32>
    %165 = arith.maximumf %163, %164 : vector<32x128xf32>
    %c0_87 = arith.constant 0 : index
    %c0_88 = arith.constant 0 : index
    %166 = vector.load %arg5[%c0_87, %c0_88] : memref<1x32xf32, #tpu.memory_space<vmem>>, vector<1x32xf32>
    %cst_89 = arith.constant dense<0.000000e+00> : vector<1x128xf32>
    %167 = tpu.matmul %166, %165, %cst_89 {dimension_numbers = #tpu.dot_dimension_numbers<[1], [0], [0], [1], [0, 0, 1, 1], [], []>} : vector<1x32xf32>, vector<32x128xf32>, vector<1x128xf32> -> vector<1x128xf32>
    %c0_90 = arith.constant 0 : index
    %168 = memref.load %arg6[%c0_90] : memref<1xf32, #tpu.memory_space<smem>>
    %169 = vector.broadcast %168 : f32 to vector<1x128xf32>
    %170 = arith.addf %167, %169 : vector<1x128xf32>
    %171 = arith.index_cast %c4_i32 : i32 to index
    %c0_91 = arith.constant 0 : index
    %172 = vector.load %arg9[%171, %c0_91] : memref<8x128xf32, #tpu.memory_space<vmem>>, vector<1x128xf32>
    tpu.vector_store %arg9[%171, %c0_91], %170 {strides = array<i32>} : memref<8x128xf32, #tpu.memory_space<vmem>>, vector<1x128xf32>,
    %173 = tpu.iota {dimensions = array<i32: 1>} : vector<1x128xi32>
    %c20_i32_92 = arith.constant 20 : i32
    %174 = vector.broadcast %c20_i32_92 : i32 to vector<1x128xi32>
    %175 = arith.cmpi slt, %173, %174 : vector<1x128xi32>
    %cst_93 = arith.constant -1.000000e+30 : f32
    %176 = vector.broadcast %cst_93 : f32 to vector<1x128xf32>
    %177 = arith.select %175, %170, %176 : vector<1x128xi1>, vector<1x128xf32>
    %cst_94 = arith.constant dense<0xFF800000> : vector<1xf32>
    %178 = vector.multi_reduction <maximumf>, %177, %cst_94 [1] : vector<1x128xf32> to vector<1xf32>
    %179 = vector.shape_cast %178 : vector<1xf32> to vector<1x1xf32>
    %180 = vector.broadcast %179 : vector<1x1xf32> to vector<1x128xf32>
    %181 = arith.subf %177, %180 : vector<1x128xf32>
    %182 = math.exp %181 : vector<1x128xf32>
    %cst_95 = arith.constant dense<0.000000e+00> : vector<1xf32>
    %183 = vector.multi_reduction <add>, %182, %cst_95 [1] : vector<1x128xf32> to vector<1xf32>
    %184 = vector.shape_cast %183 : vector<1xf32> to vector<1x1xf32>
    %185 = tpu.reciprocal %184 {approx = true} : vector<1x1xf32> -> vector<1x1xf32>
    %186 = vector.broadcast %185 : vector<1x1xf32> to vector<1x128xf32>
    %187 = arith.mulf %182, %186 : vector<1x128xf32>
    %188 = arith.index_cast %c4_i32 : i32 to index
    %c0_96 = arith.constant 0 : index
    %189 = vector.load %arg10[%188, %c0_96] : memref<8x128xf32, #tpu.memory_space<vmem>>, vector<1x128xf32>
    tpu.vector_store %arg10[%188, %c0_96], %187 {strides = array<i32>} : memref<8x128xf32, #tpu.memory_space<vmem>>, vector<1x128xf32>,
    %c5_i32 = arith.constant 5 : i32
    %190 = arith.index_cast %c5_i32 : i32 to index
    %c0_97 = arith.constant 0 : index
    %c0_98 = arith.constant 0 : index
    %191 = vector.load %arg1[%190, %c0_97, %c0_98] : memref<8x32x128xf32, #tpu.memory_space<vmem>>, vector<1x32x128xf32>
    %192 = vector.shape_cast %191 : vector<1x32x128xf32> to vector<32x128xf32>
    %c0_99 = arith.constant 0 : index
    %c0_100 = arith.constant 0 : index
    %193 = vector.load %arg4[%c0_99, %c0_100] : memref<32x32xf32, #tpu.memory_space<vmem>>, vector<32x32xf32>
    %cst_101 = arith.constant dense<0.000000e+00> : vector<32x128xf32>
    %194 = tpu.matmul %193, %192, %cst_101 {dimension_numbers = #tpu.dot_dimension_numbers<[1], [0], [0], [1], [0, 0, 1, 1], [], []>} : vector<32x32xf32>, vector<32x128xf32>, vector<32x128xf32> -> vector<32x128xf32>
    %c0_102 = arith.constant 0 : index
    %c0_103 = arith.constant 0 : index
    %195 = vector.load %arg3[%c0_102, %c0_103] : memref<32x128xf32, #tpu.memory_space<vmem>>, vector<32x128xf32>
    %196 = arith.addf %194, %195 : vector<32x128xf32>
    %197 = arith.index_cast %c5_i32 : i32 to index
    %c0_104 = arith.constant 0 : index
    %c0_105 = arith.constant 0 : index
    %198 = vector.load %arg2[%197, %c0_104, %c0_105] : memref<8x32x1xf32, #tpu.memory_space<vmem>>, vector<1x32x1xf32>
    %199 = vector.shape_cast %198 : vector<1x32x1xf32> to vector<32x1xf32>
    %200 = vector.broadcast %199 : vector<32x1xf32> to vector<32x128xf32>
    %201 = arith.addf %196, %200 : vector<32x128xf32>
    %cst_106 = arith.constant 0.000000e+00 : f32
    %202 = vector.broadcast %cst_106 : f32 to vector<32x128xf32>
    %203 = arith.maximumf %201, %202 : vector<32x128xf32>
    %c0_107 = arith.constant 0 : index
    %c0_108 = arith.constant 0 : index
    %204 = vector.load %arg5[%c0_107, %c0_108] : memref<1x32xf32, #tpu.memory_space<vmem>>, vector<1x32xf32>
    %cst_109 = arith.constant dense<0.000000e+00> : vector<1x128xf32>
    %205 = tpu.matmul %204, %203, %cst_109 {dimension_numbers = #tpu.dot_dimension_numbers<[1], [0], [0], [1], [0, 0, 1, 1], [], []>} : vector<1x32xf32>, vector<32x128xf32>, vector<1x128xf32> -> vector<1x128xf32>
    %c0_110 = arith.constant 0 : index
    %206 = memref.load %arg6[%c0_110] : memref<1xf32, #tpu.memory_space<smem>>
    %207 = vector.broadcast %206 : f32 to vector<1x128xf32>
    %208 = arith.addf %205, %207 : vector<1x128xf32>
    %209 = arith.index_cast %c5_i32 : i32 to index
    %c0_111 = arith.constant 0 : index
    %210 = vector.load %arg9[%209, %c0_111] : memref<8x128xf32, #tpu.memory_space<vmem>>, vector<1x128xf32>
    tpu.vector_store %arg9[%209, %c0_111], %208 {strides = array<i32>} : memref<8x128xf32, #tpu.memory_space<vmem>>, vector<1x128xf32>,
    %211 = tpu.iota {dimensions = array<i32: 1>} : vector<1x128xi32>
    %c20_i32_112 = arith.constant 20 : i32
    %212 = vector.broadcast %c20_i32_112 : i32 to vector<1x128xi32>
    %213 = arith.cmpi slt, %211, %212 : vector<1x128xi32>
    %cst_113 = arith.constant -1.000000e+30 : f32
    %214 = vector.broadcast %cst_113 : f32 to vector<1x128xf32>
    %215 = arith.select %213, %208, %214 : vector<1x128xi1>, vector<1x128xf32>
    %cst_114 = arith.constant dense<0xFF800000> : vector<1xf32>
    %216 = vector.multi_reduction <maximumf>, %215, %cst_114 [1] : vector<1x128xf32> to vector<1xf32>
    %217 = vector.shape_cast %216 : vector<1xf32> to vector<1x1xf32>
    %218 = vector.broadcast %217 : vector<1x1xf32> to vector<1x128xf32>
    %219 = arith.subf %215, %218 : vector<1x128xf32>
    %220 = math.exp %219 : vector<1x128xf32>
    %cst_115 = arith.constant dense<0.000000e+00> : vector<1xf32>
    %221 = vector.multi_reduction <add>, %220, %cst_115 [1] : vector<1x128xf32> to vector<1xf32>
    %222 = vector.shape_cast %221 : vector<1xf32> to vector<1x1xf32>
    %223 = tpu.reciprocal %222 {approx = true} : vector<1x1xf32> -> vector<1x1xf32>
    %224 = vector.broadcast %223 : vector<1x1xf32> to vector<1x128xf32>
    %225 = arith.mulf %220, %224 : vector<1x128xf32>
    %226 = arith.index_cast %c5_i32 : i32 to index
    %c0_116 = arith.constant 0 : index
    %227 = vector.load %arg10[%226, %c0_116] : memref<8x128xf32, #tpu.memory_space<vmem>>, vector<1x128xf32>
    tpu.vector_store %arg10[%226, %c0_116], %225 {strides = array<i32>} : memref<8x128xf32, #tpu.memory_space<vmem>>, vector<1x128xf32>,
    %c6_i32 = arith.constant 6 : i32
    %228 = arith.index_cast %c6_i32 : i32 to index
    %c0_117 = arith.constant 0 : index
    %c0_118 = arith.constant 0 : index
    %229 = vector.load %arg1[%228, %c0_117, %c0_118] : memref<8x32x128xf32, #tpu.memory_space<vmem>>, vector<1x32x128xf32>
    %230 = vector.shape_cast %229 : vector<1x32x128xf32> to vector<32x128xf32>
    %c0_119 = arith.constant 0 : index
    %c0_120 = arith.constant 0 : index
    %231 = vector.load %arg4[%c0_119, %c0_120] : memref<32x32xf32, #tpu.memory_space<vmem>>, vector<32x32xf32>
    %cst_121 = arith.constant dense<0.000000e+00> : vector<32x128xf32>
    %232 = tpu.matmul %231, %230, %cst_121 {dimension_numbers = #tpu.dot_dimension_numbers<[1], [0], [0], [1], [0, 0, 1, 1], [], []>} : vector<32x32xf32>, vector<32x128xf32>, vector<32x128xf32> -> vector<32x128xf32>
    %c0_122 = arith.constant 0 : index
    %c0_123 = arith.constant 0 : index
    %233 = vector.load %arg3[%c0_122, %c0_123] : memref<32x128xf32, #tpu.memory_space<vmem>>, vector<32x128xf32>
    %234 = arith.addf %232, %233 : vector<32x128xf32>
    %235 = arith.index_cast %c6_i32 : i32 to index
    %c0_124 = arith.constant 0 : index
    %c0_125 = arith.constant 0 : index
    %236 = vector.load %arg2[%235, %c0_124, %c0_125] : memref<8x32x1xf32, #tpu.memory_space<vmem>>, vector<1x32x1xf32>
    %237 = vector.shape_cast %236 : vector<1x32x1xf32> to vector<32x1xf32>
    %238 = vector.broadcast %237 : vector<32x1xf32> to vector<32x128xf32>
    %239 = arith.addf %234, %238 : vector<32x128xf32>
    %cst_126 = arith.constant 0.000000e+00 : f32
    %240 = vector.broadcast %cst_126 : f32 to vector<32x128xf32>
    %241 = arith.maximumf %239, %240 : vector<32x128xf32>
    %c0_127 = arith.constant 0 : index
    %c0_128 = arith.constant 0 : index
    %242 = vector.load %arg5[%c0_127, %c0_128] : memref<1x32xf32, #tpu.memory_space<vmem>>, vector<1x32xf32>
    %cst_129 = arith.constant dense<0.000000e+00> : vector<1x128xf32>
    %243 = tpu.matmul %242, %241, %cst_129 {dimension_numbers = #tpu.dot_dimension_numbers<[1], [0], [0], [1], [0, 0, 1, 1], [], []>} : vector<1x32xf32>, vector<32x128xf32>, vector<1x128xf32> -> vector<1x128xf32>
    %c0_130 = arith.constant 0 : index
    %244 = memref.load %arg6[%c0_130] : memref<1xf32, #tpu.memory_space<smem>>
    %245 = vector.broadcast %244 : f32 to vector<1x128xf32>
    %246 = arith.addf %243, %245 : vector<1x128xf32>
    %247 = arith.index_cast %c6_i32 : i32 to index
    %c0_131 = arith.constant 0 : index
    %248 = vector.load %arg9[%247, %c0_131] : memref<8x128xf32, #tpu.memory_space<vmem>>, vector<1x128xf32>
    tpu.vector_store %arg9[%247, %c0_131], %246 {strides = array<i32>} : memref<8x128xf32, #tpu.memory_space<vmem>>, vector<1x128xf32>,
    %249 = tpu.iota {dimensions = array<i32: 1>} : vector<1x128xi32>
    %c20_i32_132 = arith.constant 20 : i32
    %250 = vector.broadcast %c20_i32_132 : i32 to vector<1x128xi32>
    %251 = arith.cmpi slt, %249, %250 : vector<1x128xi32>
    %cst_133 = arith.constant -1.000000e+30 : f32
    %252 = vector.broadcast %cst_133 : f32 to vector<1x128xf32>
    %253 = arith.select %251, %246, %252 : vector<1x128xi1>, vector<1x128xf32>
    %cst_134 = arith.constant dense<0xFF800000> : vector<1xf32>
    %254 = vector.multi_reduction <maximumf>, %253, %cst_134 [1] : vector<1x128xf32> to vector<1xf32>
    %255 = vector.shape_cast %254 : vector<1xf32> to vector<1x1xf32>
    %256 = vector.broadcast %255 : vector<1x1xf32> to vector<1x128xf32>
    %257 = arith.subf %253, %256 : vector<1x128xf32>
    %258 = math.exp %257 : vector<1x128xf32>
    %cst_135 = arith.constant dense<0.000000e+00> : vector<1xf32>
    %259 = vector.multi_reduction <add>, %258, %cst_135 [1] : vector<1x128xf32> to vector<1xf32>
    %260 = vector.shape_cast %259 : vector<1xf32> to vector<1x1xf32>
    %261 = tpu.reciprocal %260 {approx = true} : vector<1x1xf32> -> vector<1x1xf32>
    %262 = vector.broadcast %261 : vector<1x1xf32> to vector<1x128xf32>
    %263 = arith.mulf %258, %262 : vector<1x128xf32>
    %264 = arith.index_cast %c6_i32 : i32 to index
    %c0_136 = arith.constant 0 : index
    %265 = vector.load %arg10[%264, %c0_136] : memref<8x128xf32, #tpu.memory_space<vmem>>, vector<1x128xf32>
    tpu.vector_store %arg10[%264, %c0_136], %263 {strides = array<i32>} : memref<8x128xf32, #tpu.memory_space<vmem>>, vector<1x128xf32>,
    %c7_i32 = arith.constant 7 : i32
    %266 = arith.index_cast %c7_i32 : i32 to index
    %c0_137 = arith.constant 0 : index
    %c0_138 = arith.constant 0 : index
    %267 = vector.load %arg1[%266, %c0_137, %c0_138] : memref<8x32x128xf32, #tpu.memory_space<vmem>>, vector<1x32x128xf32>
    %268 = vector.shape_cast %267 : vector<1x32x128xf32> to vector<32x128xf32>
    %c0_139 = arith.constant 0 : index
    %c0_140 = arith.constant 0 : index
    %269 = vector.load %arg4[%c0_139, %c0_140] : memref<32x32xf32, #tpu.memory_space<vmem>>, vector<32x32xf32>
    %cst_141 = arith.constant dense<0.000000e+00> : vector<32x128xf32>
    %270 = tpu.matmul %269, %268, %cst_141 {dimension_numbers = #tpu.dot_dimension_numbers<[1], [0], [0], [1], [0, 0, 1, 1], [], []>} : vector<32x32xf32>, vector<32x128xf32>, vector<32x128xf32> -> vector<32x128xf32>
    %c0_142 = arith.constant 0 : index
    %c0_143 = arith.constant 0 : index
    %271 = vector.load %arg3[%c0_142, %c0_143] : memref<32x128xf32, #tpu.memory_space<vmem>>, vector<32x128xf32>
    %272 = arith.addf %270, %271 : vector<32x128xf32>
    %273 = arith.index_cast %c7_i32 : i32 to index
    %c0_144 = arith.constant 0 : index
    %c0_145 = arith.constant 0 : index
    %274 = vector.load %arg2[%273, %c0_144, %c0_145] : memref<8x32x1xf32, #tpu.memory_space<vmem>>, vector<1x32x1xf32>
    %275 = vector.shape_cast %274 : vector<1x32x1xf32> to vector<32x1xf32>
    %276 = vector.broadcast %275 : vector<32x1xf32> to vector<32x128xf32>
    %277 = arith.addf %272, %276 : vector<32x128xf32>
    %cst_146 = arith.constant 0.000000e+00 : f32
    %278 = vector.broadcast %cst_146 : f32 to vector<32x128xf32>
    %279 = arith.maximumf %277, %278 : vector<32x128xf32>
    %c0_147 = arith.constant 0 : index
    %c0_148 = arith.constant 0 : index
    %280 = vector.load %arg5[%c0_147, %c0_148] : memref<1x32xf32, #tpu.memory_space<vmem>>, vector<1x32xf32>
    %cst_149 = arith.constant dense<0.000000e+00> : vector<1x128xf32>
    %281 = tpu.matmul %280, %279, %cst_149 {dimension_numbers = #tpu.dot_dimension_numbers<[1], [0], [0], [1], [0, 0, 1, 1], [], []>} : vector<1x32xf32>, vector<32x128xf32>, vector<1x128xf32> -> vector<1x128xf32>
    %c0_150 = arith.constant 0 : index
    %282 = memref.load %arg6[%c0_150] : memref<1xf32, #tpu.memory_space<smem>>
    %283 = vector.broadcast %282 : f32 to vector<1x128xf32>
    %284 = arith.addf %281, %283 : vector<1x128xf32>
    %285 = arith.index_cast %c7_i32 : i32 to index
    %c0_151 = arith.constant 0 : index
    %286 = vector.load %arg9[%285, %c0_151] : memref<8x128xf32, #tpu.memory_space<vmem>>, vector<1x128xf32>
    tpu.vector_store %arg9[%285, %c0_151], %284 {strides = array<i32>} : memref<8x128xf32, #tpu.memory_space<vmem>>, vector<1x128xf32>,
    %287 = tpu.iota {dimensions = array<i32: 1>} : vector<1x128xi32>
    %c20_i32_152 = arith.constant 20 : i32
    %288 = vector.broadcast %c20_i32_152 : i32 to vector<1x128xi32>
    %289 = arith.cmpi slt, %287, %288 : vector<1x128xi32>
    %cst_153 = arith.constant -1.000000e+30 : f32
    %290 = vector.broadcast %cst_153 : f32 to vector<1x128xf32>
    %291 = arith.select %289, %284, %290 : vector<1x128xi1>, vector<1x128xf32>
    %cst_154 = arith.constant dense<0xFF800000> : vector<1xf32>
    %292 = vector.multi_reduction <maximumf>, %291, %cst_154 [1] : vector<1x128xf32> to vector<1xf32>
    %293 = vector.shape_cast %292 : vector<1xf32> to vector<1x1xf32>
    %294 = vector.broadcast %293 : vector<1x1xf32> to vector<1x128xf32>
    %295 = arith.subf %291, %294 : vector<1x128xf32>
    %296 = math.exp %295 : vector<1x128xf32>
    %cst_155 = arith.constant dense<0.000000e+00> : vector<1xf32>
    %297 = vector.multi_reduction <add>, %296, %cst_155 [1] : vector<1x128xf32> to vector<1xf32>
    %298 = vector.shape_cast %297 : vector<1xf32> to vector<1x1xf32>
    %299 = tpu.reciprocal %298 {approx = true} : vector<1x1xf32> -> vector<1x1xf32>
    %300 = vector.broadcast %299 : vector<1x1xf32> to vector<1x128xf32>
    %301 = arith.mulf %296, %300 : vector<1x128xf32>
    %302 = arith.index_cast %c7_i32 : i32 to index
    %c0_156 = arith.constant 0 : index
    %303 = vector.load %arg10[%302, %c0_156] : memref<8x128xf32, #tpu.memory_space<vmem>>, vector<1x128xf32>
    tpu.vector_store %arg10[%302, %c0_156], %301 {strides = array<i32>} : memref<8x128xf32, #tpu.memory_space<vmem>>, vector<1x128xf32>,
    %c8_i32 = arith.constant 8 : i32
    %c0_157 = arith.constant 0 : index
    %c0_158 = arith.constant 0 : index
    %304 = vector.load %arg10[%c0_157, %c0_158] : memref<8x128xf32, #tpu.memory_space<vmem>>, vector<8x128xf32>
    %c0_159 = arith.constant 0 : index
    %c0_160 = arith.constant 0 : index
    %305 = vector.load %arg7[%c0_159, %c0_160] : memref<128x32xf32, #tpu.memory_space<vmem>>, vector<128x32xf32>
    %cst_161 = arith.constant dense<0.000000e+00> : vector<8x32xf32>
    %306 = tpu.matmul %304, %305, %cst_161 {dimension_numbers = #tpu.dot_dimension_numbers<[1], [0], [0], [1], [0, 0, 1, 1], [], []>} : vector<8x128xf32>, vector<128x32xf32>, vector<8x32xf32> -> vector<8x32xf32>
    %c0_162 = arith.constant 0 : index
    %c0_163 = arith.constant 0 : index
    %307 = vector.load %arg8[%c0_162, %c0_163] : memref<8x32xf32, #tpu.memory_space<vmem>>, vector<8x32xf32>
    tpu.vector_store %arg8[%c0_162, %c0_163], %306 {strides = array<i32>} : memref<8x32xf32, #tpu.memory_space<vmem>>, vector<8x32xf32>,
    return
  }
  func.func @transform_0(%arg0: i32) -> (i32, i32, i32) {
    %c0_i32 = arith.constant 0 : i32
    %c0_i32_0 = arith.constant 0 : i32
    %c0_i32_1 = arith.constant 0 : i32
    return %arg0, %c0_i32, %c0_i32_0 : i32, i32, i32
  }
  func.func @transform_1(%arg0: i32) -> (i32, i32, i32) {
    %c0_i32 = arith.constant 0 : i32
    %c0_i32_0 = arith.constant 0 : i32
    %c0_i32_1 = arith.constant 0 : i32
    return %arg0, %c0_i32, %c0_i32_0 : i32, i32, i32
  }
  func.func @transform_2(%arg0: i32) -> (i32, i32) {
    %c0_i32 = arith.constant 0 : i32
    %c0_i32_0 = arith.constant 0 : i32
    %c0_i32_1 = arith.constant 0 : i32
    return %c0_i32, %c0_i32_0 : i32, i32
  }
  func.func @transform_3(%arg0: i32) -> (i32, i32) {
    %c0_i32 = arith.constant 0 : i32
    %c0_i32_0 = arith.constant 0 : i32
    %c0_i32_1 = arith.constant 0 : i32
    return %c0_i32, %c0_i32_0 : i32, i32
  }
  func.func @transform_4(%arg0: i32) -> (i32, i32) {
    %c0_i32 = arith.constant 0 : i32
    %c0_i32_0 = arith.constant 0 : i32
    %c0_i32_1 = arith.constant 0 : i32
    return %c0_i32, %c0_i32_0 : i32, i32
  }
  func.func @transform_5(%arg0: i32) -> i32 {
    %c0_i32 = arith.constant 0 : i32
    %c0_i32_0 = arith.constant 0 : i32
    return %c0_i32 : i32
  }
  func.func @transform_6(%arg0: i32) -> (i32, i32) {
    %c0_i32 = arith.constant 0 : i32
    %c0_i32_0 = arith.constant 0 : i32
    %c0_i32_1 = arith.constant 0 : i32
    return %c0_i32, %c0_i32_0 : i32, i32
  }
  func.func @transform_7(%arg0: i32) -> (i32, i32) {
    %c0_i32 = arith.constant 0 : i32
    %c0_i32_0 = arith.constant 0 : i32
    return %arg0, %c0_i32 : i32, i32
  }
  func.func @transform_8(%arg0: i32) -> (i32, i32) {
    %c0_i32 = arith.constant 0 : i32
    %c0_i32_0 = arith.constant 0 : i32
    return %arg0, %c0_i32 : i32, i32
  }
}

</mosaic_0001>

<llo_original>
// kernel: _run.1
$region0: #{_run.1}
  #allocation0 [shape = 'u32[]', space=smem, size = 0x4, offset = 0x4, fixed_abs, tag = 'smem constant byte address 0x4 - core index']
  #allocation1 [shape = 'u32[144,128]{1,0:T(1,128)}', space=vmem, size = 0x12000, scoped, tag = 'internal scratch']
  #allocation2 [shape = 'f32[8,128]{1,0:T(8,128)}', space=vmem, size = 0x1000, scoped, tag = 'scratch operand']
  #allocation3 [shape = 'f32[1]{0:T(128)S(6)}', space=smem, size = 0x200, scoped, tag = 'scoped memory for _run.1']
  %s0 = inlined_call_operand.vmem [shape: f32[16,32,128], index: 0, kind: input, shape index: {}]
  %s1 = inlined_call_operand.vmem [shape: f32[16,32,1], index: 1, kind: input, shape index: {}]
  %s2 = inlined_call_operand.vmem [shape: f32[32,128], index: 2, kind: input, shape index: {}]
  %s3 = inlined_call_operand.vmem [shape: f32[32,32], index: 3, kind: input, shape index: {}]
  %s4 = inlined_call_operand.vmem [shape: f32[1,32], index: 4, kind: input, shape index: {}]
  %s5 = inlined_call_operand.<no memory space> [shape: f32[1], index: 5, kind: input, shape index: {}]
  %s6 = inlined_call_operand.vmem [shape: f32[128,32], index: 6, kind: input, shape index: {}]
  %s7 = inlined_call_operand.hbm [shape: f32[16,32], index: 7, kind: output, shape index: {0}]
  %s8 = inlined_call_operand.hbm [shape: f32[16,128], index: 8, kind: output, shape index: {1}]
  %9 = xla_tuple %s7, %s8
  %s10 = sld [smem:[#allocation0]]
  $region69: #{_run.1} parent=0
    _
  %s12 = ssub.s32 1, %s10
  %s13 = scalar_select 0, %s12, %s10
  %14 = sst [smem:[#allocation3]] %s5
  $region1: #{_run.1} parent=0
    #allocation4 [shape = 'u8[8192]{0}', space=vmem, size = 0x2000, scoped, tag = 'output window, operand 0']
    #allocation5 [shape = 's32[2]{0}', space=sflag, size = 0x8, scoped, tag = 'scoped memory for _run.1']
    #allocation6 [shape = 'u8[8192]{0}', space=vmem, size = 0x2000, scoped, tag = 'output window, operand 1']
    #allocation7 [shape = 's32[2]{0}', space=sflag, size = 0x8, scoped, tag = 'scoped memory for _run.1']
    %15 = vsyncpa [#allocation5], 0
    %s16 = scalar_lea.sflag [#allocation5], 1
    %17 = vsyncpa %s16, 0
    %18 = vsyncpa [#allocation7], 0
    %s19 = scalar_lea.sflag [#allocation7], 1
    %20 = vsyncpa %s19, 0
    loop: start=0, step=1, limit=4
    $region2: #{_run.1} parent=1 // loop_pre_header
      _
    $region3: #{_run.1} parent=1 // loop_header
      %s22 = sphi 0, %s26
      %p23 = scmp.ge.s32.totalorder %s22, 4
      %s32 = sphi 0, %s34
      %s35 = sphi 0, %s32
      %s36 = sphi 0, %s35
      %s52 = sphi 0, %s36
      %s58 = sphi 0, %s60
      %s61 = sphi 0, %s58
      %s62 = sphi 0, %s61
      %s78 = sphi 0, %s62
      %s82 = sphi 0, %s82
      %s84 = sphi 0, %s82
      %s85 = sphi 0, %s84
      %s99 = sphi 0, %s85
      %s103 = sphi 0, %s103
      %s105 = sphi 0, %s103
      %s106 = sphi 0, %s105
      %s120 = sphi 0, %s106
      %s124 = sphi 0, %s124
      %s126 = sphi 0, %s124
      %s127 = sphi 0, %s126
      %s141 = sphi 0, %s127
      %s145 = sphi 0, %s145
      %s147 = sphi 0, %s145
      %s148 = sphi 0, %s147
      %s162 = sphi 0, %s148
      %s166 = sphi 0, %s166
      %s168 = sphi 0, %s166
      %s169 = sphi 0, %s168
      %s183 = sphi 0, %s169
      %s189 = sphi 0, %s191
      %s192 = sphi 0, %s189
      %s193 = sphi 0, %s192
      %s209 = sphi 0, %s193
      %s215 = sphi 0, %s217
      %s218 = sphi 0, %s215
      %s219 = sphi 0, %s218
      %s235 = sphi 0, %s219
    $region4: #{_run.1} parent=1 // loop_header_branch
      %25 = sbr.rel (%p23) target = $region8
    $region5: #{_run.1} parent=1 // loop_body
      %s27 = ssub.s32 %s22, 1
      %s28 = ssub.s32 %s22, 2
      %s29 = sadd.s32 %s22, 1
      %s30 = ssub.s32 %s22, %s29
      %p31 = scmp.eq.s32.totalorder %s30, 0
      %s33 = sadd.s32 %s32, 1
      %s34 = scalar_select %p31, %s32, %s33
      %p37 = pneg %p31
      %p38 = scmp.eq.s32.totalorder %s22, 1
      %p39 = por %p37, %p38
      %p40 = scmp.ne.s32.totalorder %s32, %s35
      %p41 = scmp.eq.s32.totalorder %s22, 0
      %p42 = por %p40, %p41
      %p43 = scmp.ne.s32.totalorder %s32, %s35
      %p44 = scmp.eq.s32.totalorder %s27, 1
      %p45 = por %p43, %p44
      %p46 = scmp.ne.s32.totalorder %s35, %s36
      %p47 = scmp.eq.s32.totalorder %s27, 0
      %p48 = por %p46, %p47
      %p49 = scmp.ne.s32.totalorder %s35, %s36
      %p50 = scmp.eq.s32.totalorder %s28, 1
      %p51 = por %p49, %p50
      %p53 = scmp.ne.s32.totalorder %s36, %s52
      %p54 = scmp.eq.s32.totalorder %s28, 0
      %p55 = por %p53, %p54
      %s56 = ssub.s32 %s22, %s29
      %p57 = scmp.eq.s32.totalorder %s56, 0
      %s59 = sadd.s32 %s58, 1
      %s60 = scalar_select %p57, %s58, %s59
      %p63 = pneg %p57
      %p64 = scmp.eq.s32.totalorder %s22, 1
      %p65 = por %p63, %p64
      %p66 = scmp.ne.s32.totalorder %s58, %s61
      %p67 = scmp.eq.s32.totalorder %s22, 0
      %p68 = por %p66, %p67
      %p69 = scmp.ne.s32.totalorder %s58, %s61
      %p70 = scmp.eq.s32.totalorder %s27, 1
      %p71 = por %p69, %p70
      %p72 = scmp.ne.s32.totalorder %s61, %s62
      %p73 = scmp.eq.s32.totalorder %s27, 0
      %p74 = por %p72, %p73
      %p75 = scmp.ne.s32.totalorder %s61, %s62
      %p76 = scmp.eq.s32.totalorder %s28, 1
      %p77 = por %p75, %p76
      %p79 = scmp.ne.s32.totalorder %s62, %s78
      %p80 = scmp.eq.s32.totalorder %s28, 0
      %p81 = por %p79, %p80
      %s83 = sadd.s32 %s82, 1
      %p86 = scmp.eq.s32.totalorder %s22, 1
      %p87 = scmp.ne.s32.totalorder %s82, %s84
      %p88 = scmp.eq.s32.totalorder %s22, 0
      %p89 = por %p87, %p88
      %p90 = scmp.ne.s32.totalorder %s82, %s84
      %p91 = scmp.eq.s32.totalorder %s27, 1
      %p92 = por %p90, %p91
      %p93 = scmp.ne.s32.totalorder %s84, %s85
      %p94 = scmp.eq.s32.totalorder %s27, 0
      %p95 = por %p93, %p94
      %p96 = scmp.ne.s32.totalorder %s84, %s85
      %p97 = scmp.eq.s32.totalorder %s28, 1
      %p98 = por %p96, %p97
      %p100 = scmp.ne.s32.totalorder %s85, %s99
      %p101 = scmp.eq.s32.totalorder %s28, 0
      %p102 = por %p100, %p101
      %s104 = sadd.s32 %s103, 1
      %p107 = scmp.eq.s32.totalorder %s22, 1
      %p108 = scmp.ne.s32.totalorder %s103, %s105
      %p109 = scmp.eq.s32.totalorder %s22, 0
      %p110 = por %p108, %p109
      %p111 = scmp.ne.s32.totalorder %s103, %s105
      %p112 = scmp.eq.s32.totalorder %s27, 1
      %p113 = por %p111, %p112
      %p114 = scmp.ne.s32.totalorder %s105, %s106
      %p115 = scmp.eq.s32.totalorder %s27, 0
      %p116 = por %p114, %p115
      %p117 = scmp.ne.s32.totalorder %s105, %s106
      %p118 = scmp.eq.s32.totalorder %s28, 1
      %p119 = por %p117, %p118
      %p121 = scmp.ne.s32.totalorder %s106, %s120
      %p122 = scmp.eq.s32.totalorder %s28, 0
      %p123 = por %p121, %p122
      %s125 = sadd.s32 %s124, 1
      %p128 = scmp.eq.s32.totalorder %s22, 1
      %p129 = scmp.ne.s32.totalorder %s124, %s126
      %p130 = scmp.eq.s32.totalorder %s22, 0
      %p131 = por %p129, %p130
      %p132 = scmp.ne.s32.totalorder %s124, %s126
      %p133 = scmp.eq.s32.totalorder %s27, 1
      %p134 = por %p132, %p133
      %p135 = scmp.ne.s32.totalorder %s126, %s127
      %p136 = scmp.eq.s32.totalorder %s27, 0
      %p137 = por %p135, %p136
      %p138 = scmp.ne.s32.totalorder %s126, %s127
      %p139 = scmp.eq.s32.totalorder %s28, 1
      %p140 = por %p138, %p139
      %p142 = scmp.ne.s32.totalorder %s127, %s141
      %p143 = scmp.eq.s32.totalorder %s28, 0
      %p144 = por %p142, %p143
      %s146 = sadd.s32 %s145, 1
      %p149 = scmp.eq.s32.totalorder %s22, 1
      %p150 = scmp.ne.s32.totalorder %s145, %s147
      %p151 = scmp.eq.s32.totalorder %s22, 0
      %p152 = por %p150, %p151
      %p153 = scmp.ne.s32.totalorder %s145, %s147
      %p154 = scmp.eq.s32.totalorder %s27, 1
      %p155 = por %p153, %p154
      %p156 = scmp.ne.s32.totalorder %s147, %s148
      %p157 = scmp.eq.s32.totalorder %s27, 0
      %p158 = por %p156, %p157
      %p159 = scmp.ne.s32.totalorder %s147, %s148
      %p160 = scmp.eq.s32.totalorder %s28, 1
      %p161 = por %p159, %p160
      %p163 = scmp.ne.s32.totalorder %s148, %s162
      %p164 = scmp.eq.s32.totalorder %s28, 0
      %p165 = por %p163, %p164
      %s167 = sadd.s32 %s166, 1
      %p170 = scmp.eq.s32.totalorder %s22, 1
      %p171 = scmp.ne.s32.totalorder %s166, %s168
      %p172 = scmp.eq.s32.totalorder %s22, 0
      %p173 = por %p171, %p172
      %p174 = scmp.ne.s32.totalorder %s166, %s168
      %p175 = scmp.eq.s32.totalorder %s27, 1
      %p176 = por %p174, %p175
      %p177 = scmp.ne.s32.totalorder %s168, %s169
      %p178 = scmp.eq.s32.totalorder %s27, 0
      %p179 = por %p177, %p178
      %p180 = scmp.ne.s32.totalorder %s168, %s169
      %p181 = scmp.eq.s32.totalorder %s28, 1
      %p182 = por %p180, %p181
      %p184 = scmp.ne.s32.totalorder %s169, %s183
      %p185 = scmp.eq.s32.totalorder %s28, 0
      %p186 = por %p184, %p185
      %s187 = ssub.s32 %s22, %s29
      %p188 = scmp.eq.s32.totalorder %s187, 0
      %s190 = sadd.s32 %s189, 1
      %s191 = scalar_select %p188, %s189, %s190
      %p194 = pneg %p188
      %p195 = scmp.eq.s32.totalorder %s22, 1
      %p196 = por %p194, %p195
      %p197 = scmp.ne.s32.totalorder %s189, %s192
      %p198 = scmp.eq.s32.totalorder %s22, 0
      %p199 = por %p197, %p198
      %p200 = scmp.ne.s32.totalorder %s189, %s192
      %p201 = scmp.eq.s32.totalorder %s27, 1
      %p202 = por %p200, %p201
      %p203 = scmp.ne.s32.totalorder %s192, %s193
      %p204 = scmp.eq.s32.totalorder %s27, 0
      %p205 = por %p203, %p204
      %p206 = scmp.ne.s32.totalorder %s192, %s193
      %p207 = scmp.eq.s32.totalorder %s28, 1
      %p208 = por %p206, %p207
      %p210 = scmp.ne.s32.totalorder %s193, %s209
      %p211 = scmp.eq.s32.totalorder %s28, 0
      %p212 = por %p210, %p211
      %s213 = ssub.s32 %s22, %s29
      %p214 = scmp.eq.s32.totalorder %s213, 0
      %s216 = sadd.s32 %s215, 1
      %s217 = scalar_select %p214, %s215, %s216
      %p220 = pneg %p214
      %p221 = scmp.eq.s32.totalorder %s22, 1
      %p222 = por %p220, %p221
      %p223 = scmp.ne.s32.totalorder %s215, %s218
      %p224 = scmp.eq.s32.totalorder %s22, 0
      %p225 = por %p223, %p224
      %p226 = scmp.ne.s32.totalorder %s215, %s218
      %p227 = scmp.eq.s32.totalorder %s27, 1
      %p228 = por %p226, %p227
      %p229 = scmp.ne.s32.totalorder %s218, %s219
      %p230 = scmp.eq.s32.totalorder %s27, 0
      %p231 = por %p229, %p230
      %p232 = scmp.ne.s32.totalorder %s218, %s219
      %p233 = scmp.eq.s32.totalorder %s28, 1
      %p234 = por %p232, %p233
      %p236 = scmp.ne.s32.totalorder %s219, %s235
      %p237 = scmp.eq.s32.totalorder %s28, 0
      %p238 = por %p236, %p237
      %p239 = scmp.le.s32.totalorder 1, %s22
      %p240 = scmp.lt.s32.totalorder %s22, 3
      %p241 = pnand %p239, %p240
      %p242 = pneg %p241
      // Predicated region
      $region9: #{_run.1} parent=5 // pred_check
        _
      $region10: #{_run.1} parent=5 // pred_check_branch
        %244 = sbr.rel (%p241) target = $region12
      $region11: #{_run.1} parent=5 // pred_region
        %s245 = ssub.s32 %s22, 1
        // Predicated region
        $region13: #{_run.1} parent=11 // pred_check
          %p246 = pneg %p95
        $region14: #{_run.1} parent=11 // pred_check_branch
          %248 = sbr.rel (%p246) target = $region16
        $region15: #{_run.1} parent=11 // pred_region
          _
        $region16: #{_run.1} parent=11 // pred_fallthru
          _
        // Predicated region
        $region17: #{_run.1} parent=11 // pred_check
          %p249 = pneg %p116
        $region18: #{_run.1} parent=11 // pred_check_branch
          %251 = sbr.rel (%p249) target = $region20
        $region19: #{_run.1} parent=11 // pred_region
          _
        $region20: #{_run.1} parent=11 // pred_fallthru
          _
        // Predicated region
        $region21: #{_run.1} parent=11 // pred_check
          %p252 = pneg %p137
        $region22: #{_run.1} parent=11 // pred_check_branch
          %254 = sbr.rel (%p252) target = $region24
        $region23: #{_run.1} parent=11 // pred_region
          _
        $region24: #{_run.1} parent=11 // pred_fallthru
          _
        // Predicated region
        $region25: #{_run.1} parent=11 // pred_check
          %p255 = pneg %p158
        $region26: #{_run.1} parent=11 // pred_check_branch
          %257 = sbr.rel (%p255) target = $region28
        $region27: #{_run.1} parent=11 // pred_region
          _
        $region28: #{_run.1} parent=11 // pred_fallthru
          _
        // Predicated region
        $region29: #{_run.1} parent=11 // pred_check
          %p258 = pneg %p179
        $region30: #{_run.1} parent=11 // pred_check_branch
          %260 = sbr.rel (%p258) target = $region32
        $region31: #{_run.1} parent=11 // pred_region
          _
        $region32: #{_run.1} parent=11 // pred_fallthru
          _
      $region12: #{_run.1} parent=5 // pred_fallthru
        _
      %p261 = scmp.lt.s32.totalorder %s22, 2
      // Predicated region
      $region33: #{_run.1} parent=5 // pred_check
        %p262 = pneg %p261
      $region34: #{_run.1} parent=5 // pred_check_branch
        %264 = sbr.rel (%p262) target = $region36
      $region35: #{_run.1} parent=5 // pred_region
        // Predicated region
        $region37: #{_run.1} parent=35 // pred_check
          %p265 = pneg %p42
        $region38: #{_run.1} parent=35 // pred_check_branch
          %267 = sbr.rel (%p265) target = $region40
        $region39: #{_run.1} parent=35 // pred_region
          %s268 = smul.u32 8, %s22
          %p269 = scmp.lt.s32.totalorder %s268, 15
          %s270 = scalar_select %p269, %s268, 15
          %s271 = smul.addr %s270, 4
          %s272 = smul.addr %s271, 8
          %s273 = scalar_lea.vmem %s0, %s272
          %s274 = smul.u32 8, %s22
        $region40: #{_run.1} parent=35 // pred_fallthru
          _
        // Predicated region
        $region41: #{_run.1} parent=35 // pred_check
          %p275 = pneg %p68
        $region42: #{_run.1} parent=35 // pred_check_branch
          %277 = sbr.rel (%p275) target = $region44
        $region43: #{_run.1} parent=35 // pred_region
          %s278 = smul.u32 8, %s22
          %p279 = scmp.lt.s32.totalorder %s278, 15
          %s280 = scalar_select %p279, %s278, 15
          %s281 = smul.addr %s280, 4
          %s282 = smul.addr %s281, 8
          %s283 = scalar_lea.vmem %s1, %s282
          %s284 = smul.u32 8, %s22
        $region44: #{_run.1} parent=35 // pred_fallthru
          _
      $region36: #{_run.1} parent=5 // pred_fallthru
        _
      %p285 = scmp.le.s32.totalorder 1, %s22
      %p286 = scmp.lt.s32.totalorder %s22, 3
      %p287 = pnand %p285, %p286
      %p288 = pneg %p287
      // Predicated region
      $region45: #{_run.1} parent=5 // pred_check
        _
      $region46: #{_run.1} parent=5 // pred_check_branch
        %290 = sbr.rel (%p287) target = $region48
      $region47: #{_run.1} parent=5 // pred_region
        %s291 = ssub.s32 %s22, 1
        %s292 = smul.u32 8, %s27
        %p293 = scmp.lt.s32.totalorder %s292, 15
        %s294 = scalar_select %p293, %s292, 15
        %s295 = smul.addr %s294, 4
        %s296 = smul.addr %s295, 8
        %s297 = scalar_lea.vmem %s0, %s296
        %p298 = pneg %p48
        %p299 = pneg %p45
        %s300 = smul.u32 8, %s27
        %p301 = scmp.lt.s32.totalorder %s300, 15
        %s302 = scalar_select %p301, %s300, 15
        %s303 = smul.addr %s302, 4
        %s304 = smul.addr %s303, 8
        %s305 = scalar_lea.vmem %s1, %s304
        %p306 = pneg %p74
        %p307 = pneg %p71
        %p308 = pneg %p95
        %p309 = pneg %p92
        %p310 = pneg %p116
        %p311 = pneg %p113
        %p312 = pneg %p137
        %p313 = pneg %p134
        %p314 = pneg %p158
        %p315 = pneg %p155
        %p316 = pneg %p179
        %p317 = pneg %p176
        %p318 = pneg %p205
        %p319 = pneg %p202
        %s320 = sand.u32 %s192, 1
        %s321 = scalar_lea.sflag [#allocation5], %s320
        %s322 = sand.u32 %s192, 1
        %s323 = smul.addr %s322, 8
        %s324 = scalar_lea.vmem [#allocation4], %s323
        %p325 = pneg %p231
        %p326 = pneg %p228
        %s327 = sand.u32 %s218, 1
        %s328 = scalar_lea.sflag [#allocation7], %s327
        %s329 = sand.u32 %s218, 1
        %s330 = smul.addr %s329, 8
        %s331 = scalar_lea.vmem [#allocation6], %s330
        %s332 = smul.u32 8, %s27
        %p333 = scmp.lt.s32.totalorder %s332, 15
        %s334 = scalar_select %p333, %s332, 15
        %s335 = smul.addr %s334, 4
        %s336 = smul.addr %s335, 8
        %s337 = scalar_lea.vmem %s0, %s336
        %s338 = smul.u32 8, %s27
        %s339 = smul.u32 8, %s27
        %p340 = scmp.lt.s32.totalorder %s339, 15
        %s341 = scalar_select %p340, %s339, 15
        %s342 = smul.addr %s341, 4
        %s343 = smul.addr %s342, 8
        %s344 = scalar_lea.vmem %s1, %s343
        %s345 = smul.u32 8, %s27
        %v346 = vld [vmem:[%s337] sm:$0xff]
        %v347 = vld [vmem:[%s337 + $0x8] sm:$0xff]
        %v348 = vld [vmem:[%s337 + $0x10] sm:$0xff]
        %v349 = vld [vmem:[%s337 + $0x18] sm:$0xff]
        %v350 = vld [vmem:[%s3] sm:$0xff]
        %v351 = vld [vmem:[%s3 + $0x8] sm:$0xff]
        %v352 = vld [vmem:[%s3 + $0x10] sm:$0xff]
        %v353 = vld [vmem:[%s3 + $0x18] sm:$0xff]
        %v354 = vld [vmem:[%s2] sm:$0xff]
        %v355 = vld [vmem:[%s2 + $0x8] sm:$0xff]
        %v356 = vld [vmem:[%s2 + $0x10] sm:$0xff]
        %v357 = vld [vmem:[%s2 + $0x18] sm:$0xff]
        %vm358 = vcmask 261120
        %v360 = vsel %vm358, %v350, 0
        %v363 = vsel %vm358, %v351, 0
        %v366 = vsel %vm358, %v352, 0
        %v369 = vsel %vm358, %v353, 0
        %371 = vmatprep.subr.mxu0 0.0
        %372 = vmatpush1.msra.mxu0 %v346
        %373 = vmatprep.subr.mxu0 0.0
        %374 = vmatpush1.msra.mxu0 %v347
        %375 = vmatprep.subr.mxu0 0.0
        %376 = vmatpush1.msra.mxu0 %v348
        %377 = vmatprep.subr.mxu0 0.0
        %378 = vmatpush1.msra.mxu0 %v349
        %379 = vmatprep.subr.mxu0 0.0
        %380 = vmatpush1.msra.mxu0 0.0
        %381 = vmatprep.subr.mxu0 0.0
        %382 = vmatpush1.msra.mxu0 0.0
        %383 = vmatprep.subr.mxu0 0.0
        %384 = vmatpush1.msra.mxu0 0.0
        %385 = vmatprep.subr.mxu0 0.0
        %386 = vmatpush1.msra.mxu0 0.0
        %387 = vmatprep.subr.mxu0 0.0
        %388 = vmatpush1.msra.mxu0 0.0
        %389 = vmatprep.subr.mxu0 0.0
        %390 = vmatpush1.msra.mxu0 0.0
        %391 = vmatprep.subr.mxu0 0.0
        %392 = vmatpush1.msra.mxu0 0.0
        %393 = vmatprep.subr.mxu0 0.0
        %394 = vmatpush1.msra.mxu0 0.0
        %395 = vmatprep.subr.mxu0 0.0
        %396 = vmatpush1.msra.mxu0 0.0
        %397 = vmatprep.subr.mxu0 0.0
        %398 = vmatpush1.msra.mxu0 0.0
        %399 = vmatprep.subr.mxu0 0.0
        %400 = vmatpush1.msra.mxu0 0.0
        %401 = vmatprep.subr.mxu0 0.0
        %402 = vmatpush1.msra.mxu0 0.0
        %403 = vmatprep.subr.mxu0 0.0
        %404 = vmatpush1.msra.mxu0 0.0
        %405 = vmatprep.subr.mxu0 0.0
        %406 = vmatpush1.msra.mxu0 0.0
        %407 = vmatprep.subr.mxu0 0.0
        %408 = vmatpush1.msra.mxu0 0.0
        %409 = vmatprep.subr.mxu0 0.0
        %410 = vmatpush1.msra.mxu0 0.0
        %411 = vmatprep.subr.mxu0 0.0
        %412 = vmatpush1.msra.mxu0 0.0
        %413 = vmatprep.subr.mxu0 0.0
        %414 = vmatpush1.msra.mxu0 0.0
        %415 = vmatprep.subr.mxu0 0.0
        %416 = vmatpush1.msra.mxu0 0.0
        %417 = vmatprep.subr.mxu0 0.0
        %418 = vmatpush1.msra.mxu0 0.0
        %419 = vmatprep.subr.mxu0 0.0
        %420 = vmatpush1.msra.mxu0 0.0
        %421 = vmatprep.subr.mxu0 0.0
        %422 = vmatpush1.msra.mxu0 0.0
        %423 = vmatprep.subr.mxu0 0.0
        %424 = vmatpush1.msra.mxu0 0.0
        %425 = vmatprep.subr.mxu0 0.0
        %426 = vmatpush1.msra.mxu0 0.0
        %427 = vmatprep.subr.mxu0 0.0
        %428 = vmatpush1.msra.mxu0 0.0
        %429 = vmatprep.subr.mxu0 0.0
        %430 = vmatpush1.msra.mxu0 0.0
        %431 = vmatprep.subr.mxu0 0.0
        %432 = vmatpush1.msra.mxu0 0.0
        %433 = vmatprep.subr.mxu0 0.0
        %434 = vmatpush1.msra.mxu0 0.0
        %435 = vmatprep.mubr.f32.mxu0 0.0
        %436 = vmatmul.mubr.f32.gmra.mrb[0].mxu0 %v360
        %v437 = vpop.f32.mrb[0].mxu0
        %v438 = vadd.f32 %v354, %v437
        %v439 = vpop.f32.mrb[0].mxu0
        %440 = vmatprep.mubr.f32.mxu0 0.0
        %441 = vmatmul.mubr.f32.gmra.mrb[0].mxu0 %v363
        %v442 = vpop.f32.mrb[0].mxu0
        %v443 = vadd.f32 %v355, %v442
        %v444 = vpop.f32.mrb[0].mxu0
        %445 = vmatprep.mubr.f32.mxu0 0.0
        %446 = vmatmul.mubr.f32.gmra.mrb[0].mxu0 %v366
        %v447 = vpop.f32.mrb[0].mxu0
        %v448 = vadd.f32 %v356, %v447
        %v449 = vpop.f32.mrb[0].mxu0
        %450 = vmatprep.mubr.f32.mxu0 0.0
        %451 = vmatmul.mubr.f32.gmra.mrb[0].mxu0 %v369
        %v452 = vpop.f32.mrb[0].mxu0
        %v453 = vadd.f32 %v357, %v452
        %v454 = vpop.f32.mrb[0].mxu0
        %455 = vdwg.mxu0
        %v456 = vld [vmem:[%s344] sm:$0xff]
        %v457 = vld [vmem:[%s344 + $0x8] sm:$0xff]
        %v458 = vld [vmem:[%s344 + $0x10] sm:$0xff]
        %v459 = vld [vmem:[%s344 + $0x18] sm:$0xff]
        %461 = vset.pattern.permute.xlu0 0
        %462 = vperm.xlu0 %461, %v456
        %v463 = vpop.permute.xlu0 %462
        %466 = vset.pattern.permute.xlu0 0
        %467 = vperm.xlu0 %466, %v457
        %v468 = vpop.permute.xlu0 %467
        %471 = vset.pattern.permute.xlu0 0
        %472 = vperm.xlu0 %471, %v458
        %v473 = vpop.permute.xlu0 %472
        %476 = vset.pattern.permute.xlu0 0
        %477 = vperm.xlu0 %476, %v459
        %v478 = vpop.permute.xlu0 %477
        %v480 = vadd.f32 %v438, %v463
        %v481 = vadd.f32 %v443, %v468
        %v482 = vadd.f32 %v448, %v473
        %v483 = vadd.f32 %v453, %v478
        %v484 = vmax.f32 %v480, 0.0
        %v485 = vmax.f32 %v481, 0.0
        %v486 = vmax.f32 %v482, 0.0
        %v487 = vmax.f32 %v483, 0.0
        %v488 = vld [vmem:[%s4] sm:$0x1]
        %s489 = sld [smem:[#allocation3]]
        %v490 = vstv %s489
        %v492 = vsel %vm358, %v488, 0
        %494 = vmatprep.subr.mxu0 0.0
        %495 = vmatpush1.msra.mxu0 %v484
        %496 = vmatprep.subr.mxu0 0.0
        %497 = vmatpush1.msra.mxu0 %v485
        %498 = vmatprep.subr.mxu0 0.0
        %499 = vmatpush1.msra.mxu0 %v486
        %500 = vmatprep.subr.mxu0 0.0
        %501 = vmatpush1.msra.mxu0 %v487
        %502 = vmatprep.subr.mxu0 0.0
        %503 = vmatpush1.msra.mxu0 0.0
        %504 = vmatprep.subr.mxu0 0.0
        %505 = vmatpush1.msra.mxu0 0.0
        %506 = vmatprep.subr.mxu0 0.0
        %507 = vmatpush1.msra.mxu0 0.0
        %508 = vmatprep.subr.mxu0 0.0
        %509 = vmatpush1.msra.mxu0 0.0
        %510 = vmatprep.subr.mxu0 0.0
        %511 = vmatpush1.msra.mxu0 0.0
        %512 = vmatprep.subr.mxu0 0.0
        %513 = vmatpush1.msra.mxu0 0.0
        %514 = vmatprep.subr.mxu0 0.0
        %515 = vmatpush1.msra.mxu0 0.0
        %516 = vmatprep.subr.mxu0 0.0
        %517 = vmatpush1.msra.mxu0 0.0
        %518 = vmatprep.subr.mxu0 0.0
        %519 = vmatpush1.msra.mxu0 0.0
        %520 = vmatprep.subr.mxu0 0.0
        %521 = vmatpush1.msra.mxu0 0.0
        %522 = vmatprep.subr.mxu0 0.0
        %523 = vmatpush1.msra.mxu0 0.0
        %524 = vmatprep.subr.mxu0 0.0
        %525 = vmatpush1.msra.mxu0 0.0
        %526 = vmatprep.subr.mxu0 0.0
        %527 = vmatpush1.msra.mxu0 0.0
        %528 = vmatprep.subr.mxu0 0.0
        %529 = vmatpush1.msra.mxu0 0.0
        %530 = vmatprep.subr.mxu0 0.0
        %531 = vmatpush1.msra.mxu0 0.0
        %532 = vmatprep.subr.mxu0 0.0
        %533 = vmatpush1.msra.mxu0 0.0
        %534 = vmatprep.subr.mxu0 0.0
        %535 = vmatpush1.msra.mxu0 0.0
        %536 = vmatprep.subr.mxu0 0.0
        %537 = vmatpush1.msra.mxu0 0.0
        %538 = vmatprep.subr.mxu0 0.0
        %539 = vmatpush1.msra.mxu0 0.0
        %540 = vmatprep.subr.mxu0 0.0
        %541 = vmatpush1.msra.mxu0 0.0
        %542 = vmatprep.subr.mxu0 0.0
        %543 = vmatpush1.msra.mxu0 0.0
        %544 = vmatprep.subr.mxu0 0.0
        %545 = vmatpush1.msra.mxu0 0.0
        %546 = vmatprep.subr.mxu0 0.0
        %547 = vmatpush1.msra.mxu0 0.0
        %548 = vmatprep.subr.mxu0 0.0
        %549 = vmatpush1.msra.mxu0 0.0
        %550 = vmatprep.subr.mxu0 0.0
        %551 = vmatpush1.msra.mxu0 0.0
        %552 = vmatprep.subr.mxu0 0.0
        %553 = vmatpush1.msra.mxu0 0.0
        %554 = vmatprep.subr.mxu0 0.0
        %555 = vmatpush1.msra.mxu0 0.0
        %556 = vmatprep.subr.mxu0 0.0
        %557 = vmatpush1.msra.mxu0 0.0
        %558 = vmatprep.mubr.f32.mxu0 0.0
        %559 = vmatmul.mubr.f32.gmra.mrb[0].mxu0 %v492
        %v560 = vpop.f32.mrb[0].mxu0
        %v561 = vadd.f32 %v490, %v560
        %v562 = vpop.f32.mrb[0].mxu0
        %563 = vdwg.mxu0
        %564 = vst [vmem:[%s331] sm:$0x1] %v561
        %v565 = vlaneseq
        %v566 = vand.u32 %v565, 127
        %vm567 = vcmp.lt.s32.totalorder %v566, 20
        %v568 = vsel %vm567, %v561, -1e+30
        %vm569 = vcmask 1040384
        %v570 = vsel %vm569, %v568, -inf
        %571 = vmax.xlane.f32.xlu0 %v570
        %v572 = vpop.xlane.xlu0 %571
        %v573 = vsub.f32 %v568, %v572
        %v574 = vmul.f32 %v573, 1.442695
        %v575 = vpow.pop %v574
        %v576 = vsel %vm569, %v575, 0.0
        %577 = vadd.xlane.f32.xlu0 %v576
        %v578 = vpop.xlane.xlu0 %577
        %v579 = vrcp.pop %v578
        %v580 = vmul.f32 %v575, %v579
        %581 = vst [vmem:[#allocation2] sm:$0x1] %v580
        %s582 = scalar_lea.vmem %s337, 32
        %v583 = vld [vmem:[%s582] sm:$0xff]
        %v584 = vld [vmem:[%s582 + $0x8] sm:$0xff]
        %v585 = vld [vmem:[%s582 + $0x10] sm:$0xff]
        %v586 = vld [vmem:[%s582 + $0x18] sm:$0xff]
        %v587 = vld [vmem:[%s3] sm:$0xff]
        %v588 = vld [vmem:[%s3 + $0x8] sm:$0xff]
        %v589 = vld [vmem:[%s3 + $0x10] sm:$0xff]
        %v590 = vld [vmem:[%s3 + $0x18] sm:$0xff]
        %v591 = vld [vmem:[%s2] sm:$0xff]
        %v592 = vld [vmem:[%s2 + $0x8] sm:$0xff]
        %v593 = vld [vmem:[%s2 + $0x10] sm:$0xff]
        %v594 = vld [vmem:[%s2 + $0x18] sm:$0xff]
        %v596 = vsel %vm358, %v587, 0
        %v599 = vsel %vm358, %v588, 0
        %v602 = vsel %vm358, %v589, 0
        %v605 = vsel %vm358, %v590, 0
        %607 = vmatprep.subr.mxu0 0.0
        %608 = vmatpush1.msra.mxu0 %v583
        %609 = vmatprep.subr.mxu0 0.0
        %610 = vmatpush1.msra.mxu0 %v584
        %611 = vmatprep.subr.mxu0 0.0
        %612 = vmatpush1.msra.mxu0 %v585
        %613 = vmatprep.subr.mxu0 0.0
        %614 = vmatpush1.msra.mxu0 %v586
        %615 = vmatprep.subr.mxu0 0.0
        %616 = vmatpush1.msra.mxu0 0.0
        %617 = vmatprep.subr.mxu0 0.0
        %618 = vmatpush1.msra.mxu0 0.0
        %619 = vmatprep.subr.mxu0 0.0
        %620 = vmatpush1.msra.mxu0 0.0
        %621 = vmatprep.subr.mxu0 0.0
        %622 = vmatpush1.msra.mxu0 0.0
        %623 = vmatprep.subr.mxu0 0.0
        %624 = vmatpush1.msra.mxu0 0.0
        %625 = vmatprep.subr.mxu0 0.0
        %626 = vmatpush1.msra.mxu0 0.0
        %627 = vmatprep.subr.mxu0 0.0
        %628 = vmatpush1.msra.mxu0 0.0
        %629 = vmatprep.subr.mxu0 0.0
        %630 = vmatpush1.msra.mxu0 0.0
        %631 = vmatprep.subr.mxu0 0.0
        %632 = vmatpush1.msra.mxu0 0.0
        %633 = vmatprep.subr.mxu0 0.0
        %634 = vmatpush1.msra.mxu0 0.0
        %635 = vmatprep.subr.mxu0 0.0
        %636 = vmatpush1.msra.mxu0 0.0
        %637 = vmatprep.subr.mxu0 0.0
        %638 = vmatpush1.msra.mxu0 0.0
        %639 = vmatprep.subr.mxu0 0.0
        %640 = vmatpush1.msra.mxu0 0.0
        %641 = vmatprep.subr.mxu0 0.0
        %642 = vmatpush1.msra.mxu0 0.0
        %643 = vmatprep.subr.mxu0 0.0
        %644 = vmatpush1.msra.mxu0 0.0
        %645 = vmatprep.subr.mxu0 0.0
        %646 = vmatpush1.msra.mxu0 0.0
        %647 = vmatprep.subr.mxu0 0.0
        %648 = vmatpush1.msra.mxu0 0.0
        %649 = vmatprep.subr.mxu0 0.0
        %650 = vmatpush1.msra.mxu0 0.0
        %651 = vmatprep.subr.mxu0 0.0
        %652 = vmatpush1.msra.mxu0 0.0
        %653 = vmatprep.subr.mxu0 0.0
        %654 = vmatpush1.msra.mxu0 0.0
        %655 = vmatprep.subr.mxu0 0.0
        %656 = vmatpush1.msra.mxu0 0.0
        %657 = vmatprep.subr.mxu0 0.0
        %658 = vmatpush1.msra.mxu0 0.0
        %659 = vmatprep.subr.mxu0 0.0
        %660 = vmatpush1.msra.mxu0 0.0
        %661 = vmatprep.subr.mxu0 0.0
        %662 = vmatpush1.msra.mxu0 0.0
        %663 = vmatprep.subr.mxu0 0.0
        %664 = vmatpush1.msra.mxu0 0.0
        %665 = vmatprep.subr.mxu0 0.0
        %666 = vmatpush1.msra.mxu0 0.0
        %667 = vmatprep.subr.mxu0 0.0
        %668 = vmatpush1.msra.mxu0 0.0
        %669 = vmatprep.subr.mxu0 0.0
        %670 = vmatpush1.msra.mxu0 0.0
        %671 = vmatprep.mubr.f32.mxu0 0.0
        %672 = vmatmul.mubr.f32.gmra.mrb[0].mxu0 %v596
        %v673 = vpop.f32.mrb[0].mxu0
        %v674 = vadd.f32 %v591, %v673
        %v675 = vpop.f32.mrb[0].mxu0
        %676 = vmatprep.mubr.f32.mxu0 0.0
        %677 = vmatmul.mubr.f32.gmra.mrb[0].mxu0 %v599
        %v678 = vpop.f32.mrb[0].mxu0
        %v679 = vadd.f32 %v592, %v678
        %v680 = vpop.f32.mrb[0].mxu0
        %681 = vmatprep.mubr.f32.mxu0 0.0
        %682 = vmatmul.mubr.f32.gmra.mrb[0].mxu0 %v602
        %v683 = vpop.f32.mrb[0].mxu0
        %v684 = vadd.f32 %v593, %v683
        %v685 = vpop.f32.mrb[0].mxu0
        %686 = vmatprep.mubr.f32.mxu0 0.0
        %687 = vmatmul.mubr.f32.gmra.mrb[0].mxu0 %v605
        %v688 = vpop.f32.mrb[0].mxu0
        %v689 = vadd.f32 %v594, %v688
        %v690 = vpop.f32.mrb[0].mxu0
        %691 = vdwg.mxu0
        %s692 = scalar_lea.vmem %s344, 32
        %v693 = vld [vmem:[%s692] sm:$0xff]
        %v694 = vld [vmem:[%s692 + $0x8] sm:$0xff]
        %v695 = vld [vmem:[%s692 + $0x10] sm:$0xff]
        %v696 = vld [vmem:[%s692 + $0x18] sm:$0xff]
        %698 = vset.pattern.permute.xlu0 0
        %699 = vperm.xlu0 %698, %v693
        %v700 = vpop.permute.xlu0 %699
        %703 = vset.pattern.permute.xlu0 0
        %704 = vperm.xlu0 %703, %v694
        %v705 = vpop.permute.xlu0 %704
        %708 = vset.pattern.permute.xlu0 0
        %709 = vperm.xlu0 %708, %v695
        %v710 = vpop.permute.xlu0 %709
        %713 = vset.pattern.permute.xlu0 0
        %714 = vperm.xlu0 %713, %v696
        %v715 = vpop.permute.xlu0 %714
        %v717 = vadd.f32 %v674, %v700
        %v718 = vadd.f32 %v679, %v705
        %v719 = vadd.f32 %v684, %v710
        %v720 = vadd.f32 %v689, %v715
        %v721 = vmax.f32 %v717, 0.0
        %v722 = vmax.f32 %v718, 0.0
        %v723 = vmax.f32 %v719, 0.0
        %v724 = vmax.f32 %v720, 0.0
        %v725 = vld [vmem:[%s4] sm:$0x1]
        %s726 = sld [smem:[#allocation3]]
        %v727 = vstv %s726
        %v729 = vsel %vm358, %v725, 0
        %731 = vmatprep.subr.mxu0 0.0
        %732 = vmatpush1.msra.mxu0 %v721
        %733 = vmatprep.subr.mxu0 0.0
        %734 = vmatpush1.msra.mxu0 %v722
        %735 = vmatprep.subr.mxu0 0.0
        %736 = vmatpush1.msra.mxu0 %v723
        %737 = vmatprep.subr.mxu0 0.0
        %738 = vmatpush1.msra.mxu0 %v724
        %739 = vmatprep.subr.mxu0 0.0
        %740 = vmatpush1.msra.mxu0 0.0
        %741 = vmatprep.subr.mxu0 0.0
        %742 = vmatpush1.msra.mxu0 0.0
        %743 = vmatprep.subr.mxu0 0.0
        %744 = vmatpush1.msra.mxu0 0.0
        %745 = vmatprep.subr.mxu0 0.0
        %746 = vmatpush1.msra.mxu0 0.0
        %747 = vmatprep.subr.mxu0 0.0
        %748 = vmatpush1.msra.mxu0 0.0
        %749 = vmatprep.subr.mxu0 0.0
        %750 = vmatpush1.msra.mxu0 0.0
        %751 = vmatprep.subr.mxu0 0.0
        %752 = vmatpush1.msra.mxu0 0.0
        %753 = vmatprep.subr.mxu0 0.0
        %754 = vmatpush1.msra.mxu0 0.0
        %755 = vmatprep.subr.mxu0 0.0
        %756 = vmatpush1.msra.mxu0 0.0
        %757 = vmatprep.subr.mxu0 0.0
        %758 = vmatpush1.msra.mxu0 0.0
        %759 = vmatprep.subr.mxu0 0.0
        %760 = vmatpush1.msra.mxu0 0.0
        %761 = vmatprep.subr.mxu0 0.0
        %762 = vmatpush1.msra.mxu0 0.0
        %763 = vmatprep.subr.mxu0 0.0
        %764 = vmatpush1.msra.mxu0 0.0
        %765 = vmatprep.subr.mxu0 0.0
        %766 = vmatpush1.msra.mxu0 0.0
        %767 = vmatprep.subr.mxu0 0.0
        %768 = vmatpush1.msra.mxu0 0.0
        %769 = vmatprep.subr.mxu0 0.0
        %770 = vmatpush1.msra.mxu0 0.0
        %771 = vmatprep.subr.mxu0 0.0
        %772 = vmatpush1.msra.mxu0 0.0
        %773 = vmatprep.subr.mxu0 0.0
        %774 = vmatpush1.msra.mxu0 0.0
        %775 = vmatprep.subr.mxu0 0.0
        %776 = vmatpush1.msra.mxu0 0.0
        %777 = vmatprep.subr.mxu0 0.0
        %778 = vmatpush1.msra.mxu0 0.0
        %779 = vmatprep.subr.mxu0 0.0
        %780 = vmatpush1.msra.mxu0 0.0
        %781 = vmatprep.subr.mxu0 0.0
        %782 = vmatpush1.msra.mxu0 0.0
        %783 = vmatprep.subr.mxu0 0.0
        %784 = vmatpush1.msra.mxu0 0.0
        %785 = vmatprep.subr.mxu0 0.0
        %786 = vmatpush1.msra.mxu0 0.0
        %787 = vmatprep.subr.mxu0 0.0
        %788 = vmatpush1.msra.mxu0 0.0
        %789 = vmatprep.subr.mxu0 0.0
        %790 = vmatpush1.msra.mxu0 0.0
        %791 = vmatprep.subr.mxu0 0.0
        %792 = vmatpush1.msra.mxu0 0.0
        %793 = vmatprep.subr.mxu0 0.0
        %794 = vmatpush1.msra.mxu0 0.0
        %795 = vmatprep.mubr.f32.mxu0 0.0
        %796 = vmatmul.mubr.f32.gmra.mrb[0].mxu0 %v729
        %v797 = vpop.f32.mrb[0].mxu0
        %v798 = vadd.f32 %v727, %v797
        %v799 = vpop.f32.mrb[0].mxu0
        %800 = vdwg.mxu0
        %801 = vst [vmem:[%s331 + $0x1] sm:$0x1] %v798
        %v802 = vsel %vm567, %v798, -1e+30
        %v803 = vsel %vm569, %v802, -inf
        %804 = vmax.xlane.f32.xlu0 %v803
        %v805 = vpop.xlane.xlu0 %804
        %v806 = vsub.f32 %v802, %v805
        %v807 = vmul.f32 %v806, 1.442695
        %v808 = vpow.pop %v807
        %v809 = vsel %vm569, %v808, 0.0
        %810 = vadd.xlane.f32.xlu0 %v809
        %v811 = vpop.xlane.xlu0 %810
        %v812 = vrcp.pop %v811
        %v813 = vmul.f32 %v808, %v812
        %814 = vst [vmem:[#allocation2 + $0x1] sm:$0x1] %v813
        %s815 = scalar_lea.vmem %s337, 64
        %v816 = vld [vmem:[%s815] sm:$0xff]
        %v817 = vld [vmem:[%s815 + $0x8] sm:$0xff]
        %v818 = vld [vmem:[%s815 + $0x10] sm:$0xff]
        %v819 = vld [vmem:[%s815 + $0x18] sm:$0xff]
        %v820 = vld [vmem:[%s3] sm:$0xff]
        %v821 = vld [vmem:[%s3 + $0x8] sm:$0xff]
        %v822 = vld [vmem:[%s3 + $0x10] sm:$0xff]
        %v823 = vld [vmem:[%s3 + $0x18] sm:$0xff]
        %v824 = vld [vmem:[%s2] sm:$0xff]
        %v825 = vld [vmem:[%s2 + $0x8] sm:$0xff]
        %v826 = vld [vmem:[%s2 + $0x10] sm:$0xff]
        %v827 = vld [vmem:[%s2 + $0x18] sm:$0xff]
        %v829 = vsel %vm358, %v820, 0
        %v832 = vsel %vm358, %v821, 0
        %v835 = vsel %vm358, %v822, 0
        %v838 = vsel %vm358, %v823, 0
        %840 = vmatprep.subr.mxu0 0.0
        %841 = vmatpush1.msra.mxu0 %v816
        %842 = vmatprep.subr.mxu0 0.0
        %843 = vmatpush1.msra.mxu0 %v817
        %844 = vmatprep.subr.mxu0 0.0
        %845 = vmatpush1.msra.mxu0 %v818
        %846 = vmatprep.subr.mxu0 0.0
        %847 = vmatpush1.msra.mxu0 %v819
        %848 = vmatprep.subr.mxu0 0.0
        %849 = vmatpush1.msra.mxu0 0.0
        %850 = vmatprep.subr.mxu0 0.0
        %851 = vmatpush1.msra.mxu0 0.0
        %852 = vmatprep.subr.mxu0 0.0
        %853 = vmatpush1.msra.mxu0 0.0
        %854 = vmatprep.subr.mxu0 0.0
        %855 = vmatpush1.msra.mxu0 0.0
        %856 = vmatprep.subr.mxu0 0.0
        %857 = vmatpush1.msra.mxu0 0.0
        %858 = vmatprep.subr.mxu0 0.0
        %859 = vmatpush1.msra.mxu0 0.0
        %860 = vmatprep.subr.mxu0 0.0
        %861 = vmatpush1.msra.mxu0 0.0
        %862 = vmatprep.subr.mxu0 0.0
        %863 = vmatpush1.msra.mxu0 0.0
        %864 = vmatprep.subr.mxu0 0.0
        %865 = vmatpush1.msra.mxu0 0.0
        %866 = vmatprep.subr.mxu0 0.0
        %867 = vmatpush1.msra.mxu0 0.0
        %868 = vmatprep.subr.mxu0 0.0
        %869 = vmatpush1.msra.mxu0 0.0
        %870 = vmatprep.subr.mxu0 0.0
        %871 = vmatpush1.msra.mxu0 0.0
        %872 = vmatprep.subr.mxu0 0.0
        %873 = vmatpush1.msra.mxu0 0.0
        %874 = vmatprep.subr.mxu0 0.0
        %875 = vmatpush1.msra.mxu0 0.0
        %876 = vmatprep.subr.mxu0 0.0
        %877 = vmatpush1.msra.mxu0 0.0
        %878 = vmatprep.subr.mxu0 0.0
        %879 = vmatpush1.msra.mxu0 0.0
        %880 = vmatprep.subr.mxu0 0.0
        %881 = vmatpush1.msra.mxu0 0.0
        %882 = vmatprep.subr.mxu0 0.0
        %883 = vmatpush1.msra.mxu0 0.0
        %884 = vmatprep.subr.mxu0 0.0
        %885 = vmatpush1.msra.mxu0 0.0
        %886 = vmatprep.subr.mxu0 0.0
        %887 = vmatpush1.msra.mxu0 0.0
        %888 = vmatprep.subr.mxu0 0.0
        %889 = vmatpush1.msra.mxu0 0.0
        %890 = vmatprep.subr.mxu0 0.0
        %891 = vmatpush1.msra.mxu0 0.0
        %892 = vmatprep.subr.mxu0 0.0
        %893 = vmatpush1.msra.mxu0 0.0
        %894 = vmatprep.subr.mxu0 0.0
        %895 = vmatpush1.msra.mxu0 0.0
        %896 = vmatprep.subr.mxu0 0.0
        %897 = vmatpush1.msra.mxu0 0.0
        %898 = vmatprep.subr.mxu0 0.0
        %899 = vmatpush1.msra.mxu0 0.0
        %900 = vmatprep.subr.mxu0 0.0
        %901 = vmatpush1.msra.mxu0 0.0
        %902 = vmatprep.subr.mxu0 0.0
        %903 = vmatpush1.msra.mxu0 0.0
        %904 = vmatprep.mubr.f32.mxu0 0.0
        %905 = vmatmul.mubr.f32.gmra.mrb[0].mxu0 %v829
        %v906 = vpop.f32.mrb[0].mxu0
        %v907 = vadd.f32 %v824, %v906
        %v908 = vpop.f32.mrb[0].mxu0
        %909 = vmatprep.mubr.f32.mxu0 0.0
        %910 = vmatmul.mubr.f32.gmra.mrb[0].mxu0 %v832
        %v911 = vpop.f32.mrb[0].mxu0
        %v912 = vadd.f32 %v825, %v911
        %v913 = vpop.f32.mrb[0].mxu0
        %914 = vmatprep.mubr.f32.mxu0 0.0
        %915 = vmatmul.mubr.f32.gmra.mrb[0].mxu0 %v835
        %v916 = vpop.f32.mrb[0].mxu0
        %v917 = vadd.f32 %v826, %v916
        %v918 = vpop.f32.mrb[0].mxu0
        %919 = vmatprep.mubr.f32.mxu0 0.0
        %920 = vmatmul.mubr.f32.gmra.mrb[0].mxu0 %v838
        %v921 = vpop.f32.mrb[0].mxu0
        %v922 = vadd.f32 %v827, %v921
        %v923 = vpop.f32.mrb[0].mxu0
        %924 = vdwg.mxu0
        %s925 = scalar_lea.vmem %s344, 64
        %v926 = vld [vmem:[%s925] sm:$0xff]
        %v927 = vld [vmem:[%s925 + $0x8] sm:$0xff]
        %v928 = vld [vmem:[%s925 + $0x10] sm:$0xff]
        %v929 = vld [vmem:[%s925 + $0x18] sm:$0xff]
        %931 = vset.pattern.permute.xlu0 0
        %932 = vperm.xlu0 %931, %v926
        %v933 = vpop.permute.xlu0 %932
        %936 = vset.pattern.permute.xlu0 0
        %937 = vperm.xlu0 %936, %v927
        %v938 = vpop.permute.xlu0 %937
        %941 = vset.pattern.permute.xlu0 0
        %942 = vperm.xlu0 %941, %v928
        %v943 = vpop.permute.xlu0 %942
        %946 = vset.pattern.permute.xlu0 0
        %947 = vperm.xlu0 %946, %v929
        %v948 = vpop.permute.xlu0 %947
        %v950 = vadd.f32 %v907, %v933
        %v951 = vadd.f32 %v912, %v938
        %v952 = vadd.f32 %v917, %v943
        %v953 = vadd.f32 %v922, %v948
        %v954 = vmax.f32 %v950, 0.0
        %v955 = vmax.f32 %v951, 0.0
        %v956 = vmax.f32 %v952, 0.0
        %v957 = vmax.f32 %v953, 0.0
        %v958 = vld [vmem:[%s4] sm:$0x1]
        %s959 = sld [smem:[#allocation3]]
        %v960 = vstv %s959
        %v962 = vsel %vm358, %v958, 0
        %964 = vmatprep.subr.mxu0 0.0
        %965 = vmatpush1.msra.mxu0 %v954
        %966 = vmatprep.subr.mxu0 0.0
        %967 = vmatpush1.msra.mxu0 %v955
        %968 = vmatprep.subr.mxu0 0.0
        %969 = vmatpush1.msra.mxu0 %v956
        %970 = vmatprep.subr.mxu0 0.0
        %971 = vmatpush1.msra.mxu0 %v957
        %972 = vmatprep.subr.mxu0 0.0
        %973 = vmatpush1.msra.mxu0 0.0
        %974 = vmatprep.subr.mxu0 0.0
        %975 = vmatpush1.msra.mxu0 0.0
        %976 = vmatprep.subr.mxu0 0.0
        %977 = vmatpush1.msra.mxu0 0.0
        %978 = vmatprep.subr.mxu0 0.0
        %979 = vmatpush1.msra.mxu0 0.0
        %980 = vmatprep.subr.mxu0 0.0
        %981 = vmatpush1.msra.mxu0 0.0
        %982 = vmatprep.subr.mxu0 0.0
        %983 = vmatpush1.msra.mxu0 0.0
        %984 = vmatprep.subr.mxu0 0.0
        %985 = vmatpush1.msra.mxu0 0.0
        %986 = vmatprep.subr.mxu0 0.0
        %987 = vmatpush1.msra.mxu0 0.0
        %988 = vmatprep.subr.mxu0 0.0
        %989 = vmatpush1.msra.mxu0 0.0
        %990 = vmatprep.subr.mxu0 0.0
        %991 = vmatpush1.msra.mxu0 0.0
        %992 = vmatprep.subr.mxu0 0.0
        %993 = vmatpush1.msra.mxu0 0.0
        %994 = vmatprep.subr.mxu0 0.0
        %995 = vmatpush1.msra.mxu0 0.0
        %996 = vmatprep.subr.mxu0 0.0
        %997 = vmatpush1.msra.mxu0 0.0
        %998 = vmatprep.subr.mxu0 0.0
        %999 = vmatpush1.msra.mxu0 0.0
        %1000 = vmatprep.subr.mxu0 0.0
        %1001 = vmatpush1.msra.mxu0 0.0
        %1002 = vmatprep.subr.mxu0 0.0
        %1003 = vmatpush1.msra.mxu0 0.0
        %1004 = vmatprep.subr.mxu0 0.0
        %1005 = vmatpush1.msra.mxu0 0.0
        %1006 = vmatprep.subr.mxu0 0.0
        %1007 = vmatpush1.msra.mxu0 0.0
        %1008 = vmatprep.subr.mxu0 0.0
        %1009 = vmatpush1.msra.mxu0 0.0
        %1010 = vmatprep.subr.mxu0 0.0
        %1011 = vmatpush1.msra.mxu0 0.0
        %1012 = vmatprep.subr.mxu0 0.0
        %1013 = vmatpush1.msra.mxu0 0.0
        %1014 = vmatprep.subr.mxu0 0.0
        %1015 = vmatpush1.msra.mxu0 0.0
        %1016 = vmatprep.subr.mxu0 0.0
        %1017 = vmatpush1.msra.mxu0 0.0
        %1018 = vmatprep.subr.mxu0 0.0
        %1019 = vmatpush1.msra.mxu0 0.0
        %1020 = vmatprep.subr.mxu0 0.0
        %1021 = vmatpush1.msra.mxu0 0.0
        %1022 = vmatprep.subr.mxu0 0.0
        %1023 = vmatpush1.msra.mxu0 0.0
        %1024 = vmatprep.subr.mxu0 0.0
        %1025 = vmatpush1.msra.mxu0 0.0
        %1026 = vmatprep.subr.mxu0 0.0
        %1027 = vmatpush1.msra.mxu0 0.0
        %1028 = vmatprep.mubr.f32.mxu0 0.0
        %1029 = vmatmul.mubr.f32.gmra.mrb[0].mxu0 %v962
        %v1030 = vpop.f32.mrb[0].mxu0
        %v1031 = vadd.f32 %v960, %v1030
        %v1032 = vpop.f32.mrb[0].mxu0
        %1033 = vdwg.mxu0
        %1034 = vst [vmem:[%s331 + $0x2] sm:$0x1] %v1031
        %v1035 = vsel %vm567, %v1031, -1e+30
        %v1036 = vsel %vm569, %v1035, -inf
        %1037 = vmax.xlane.f32.xlu0 %v1036
        %v1038 = vpop.xlane.xlu0 %1037
        %v1039 = vsub.f32 %v1035, %v1038
        %v1040 = vmul.f32 %v1039, 1.442695
        %v1041 = vpow.pop %v1040
        %v1042 = vsel %vm569, %v1041, 0.0
        %1043 = vadd.xlane.f32.xlu0 %v1042
        %v1044 = vpop.xlane.xlu0 %1043
        %v1045 = vrcp.pop %v1044
        %v1046 = vmul.f32 %v1041, %v1045
        %1047 = vst [vmem:[#allocation2 + $0x2] sm:$0x1] %v1046
        %s1048 = scalar_lea.vmem %s337, 96
        %v1049 = vld [vmem:[%s1048] sm:$0xff]
        %v1050 = vld [vmem:[%s1048 + $0x8] sm:$0xff]
        %v1051 = vld [vmem:[%s1048 + $0x10] sm:$0xff]
        %v1052 = vld [vmem:[%s1048 + $0x18] sm:$0xff]
        %v1053 = vld [vmem:[%s3] sm:$0xff]
        %v1054 = vld [vmem:[%s3 + $0x8] sm:$0xff]
        %v1055 = vld [vmem:[%s3 + $0x10] sm:$0xff]
        %v1056 = vld [vmem:[%s3 + $0x18] sm:$0xff]
        %v1057 = vld [vmem:[%s2] sm:$0xff]
        %v1058 = vld [vmem:[%s2 + $0x8] sm:$0xff]
        %v1059 = vld [vmem:[%s2 + $0x10] sm:$0xff]
        %v1060 = vld [vmem:[%s2 + $0x18] sm:$0xff]
        %v1062 = vsel %vm358, %v1053, 0
        %v1065 = vsel %vm358, %v1054, 0
        %v1068 = vsel %vm358, %v1055, 0
        %v1071 = vsel %vm358, %v1056, 0
        %1073 = vmatprep.subr.mxu0 0.0
        %1074 = vmatpush1.msra.mxu0 %v1049
        %1075 = vmatprep.subr.mxu0 0.0
        %1076 = vmatpush1.msra.mxu0 %v1050
        %1077 = vmatprep.subr.mxu0 0.0
        %1078 = vmatpush1.msra.mxu0 %v1051
        %1079 = vmatprep.subr.mxu0 0.0
        %1080 = vmatpush1.msra.mxu0 %v1052
        %1081 = vmatprep.subr.mxu0 0.0
        %1082 = vmatpush1.msra.mxu0 0.0
        %1083 = vmatprep.subr.mxu0 0.0
        %1084 = vmatpush1.msra.mxu0 0.0
        %1085 = vmatprep.subr.mxu0 0.0
        %1086 = vmatpush1.msra.mxu0 0.0
        %1087 = vmatprep.subr.mxu0 0.0
        %1088 = vmatpush1.msra.mxu0 0.0
        %1089 = vmatprep.subr.mxu0 0.0
        %1090 = vmatpush1.msra.mxu0 0.0
        %1091 = vmatprep.subr.mxu0 0.0
        %1092 = vmatpush1.msra.mxu0 0.0
        %1093 = vmatprep.subr.mxu0 0.0
        %1094 = vmatpush1.msra.mxu0 0.0
        %1095 = vmatprep.subr.mxu0 0.0
        %1096 = vmatpush1.msra.mxu0 0.0
        %1097 = vmatprep.subr.mxu0 0.0
        %1098 = vmatpush1.msra.mxu0 0.0
        %1099 = vmatprep.subr.mxu0 0.0
        %1100 = vmatpush1.msra.mxu0 0.0
        %1101 = vmatprep.subr.mxu0 0.0
        %1102 = vmatpush1.msra.mxu0 0.0
        %1103 = vmatprep.subr.mxu0 0.0
        %1104 = vmatpush1.msra.mxu0 0.0
        %1105 = vmatprep.subr.mxu0 0.0
        %1106 = vmatpush1.msra.mxu0 0.0
        %1107 = vmatprep.subr.mxu0 0.0
        %1108 = vmatpush1.msra.mxu0 0.0
        %1109 = vmatprep.subr.mxu0 0.0
        %1110 = vmatpush1.msra.mxu0 0.0
        %1111 = vmatprep.subr.mxu0 0.0
        %1112 = vmatpush1.msra.mxu0 0.0
        %1113 = vmatprep.subr.mxu0 0.0
        %1114 = vmatpush1.msra.mxu0 0.0
        %1115 = vmatprep.subr.mxu0 0.0
        %1116 = vmatpush1.msra.mxu0 0.0
        %1117 = vmatprep.subr.mxu0 0.0
        %1118 = vmatpush1.msra.mxu0 0.0
        %1119 = vmatprep.subr.mxu0 0.0
        %1120 = vmatpush1.msra.mxu0 0.0
        %1121 = vmatprep.subr.mxu0 0.0
        %1122 = vmatpush1.msra.mxu0 0.0
        %1123 = vmatprep.subr.mxu0 0.0
        %1124 = vmatpush1.msra.mxu0 0.0
        %1125 = vmatprep.subr.mxu0 0.0
        %1126 = vmatpush1.msra.mxu0 0.0
        %1127 = vmatprep.subr.mxu0 0.0
        %1128 = vmatpush1.msra.mxu0 0.0
        %1129 = vmatprep.subr.mxu0 0.0
        %1130 = vmatpush1.msra.mxu0 0.0
        %1131 = vmatprep.subr.mxu0 0.0
        %1132 = vmatpush1.msra.mxu0 0.0
        %1133 = vmatprep.subr.mxu0 0.0
        %1134 = vmatpush1.msra.mxu0 0.0
        %1135 = vmatprep.subr.mxu0 0.0
        %1136 = vmatpush1.msra.mxu0 0.0
        %1137 = vmatprep.mubr.f32.mxu0 0.0
        %1138 = vmatmul.mubr.f32.gmra.mrb[0].mxu0 %v1062
        %v1139 = vpop.f32.mrb[0].mxu0
        %v1140 = vadd.f32 %v1057, %v1139
        %v1141 = vpop.f32.mrb[0].mxu0
        %1142 = vmatprep.mubr.f32.mxu0 0.0
        %1143 = vmatmul.mubr.f32.gmra.mrb[0].mxu0 %v1065
        %v1144 = vpop.f32.mrb[0].mxu0
        %v1145 = vadd.f32 %v1058, %v1144
        %v1146 = vpop.f32.mrb[0].mxu0
        %1147 = vmatprep.mubr.f32.mxu0 0.0
        %1148 = vmatmul.mubr.f32.gmra.mrb[0].mxu0 %v1068
        %v1149 = vpop.f32.mrb[0].mxu0
        %v1150 = vadd.f32 %v1059, %v1149
        %v1151 = vpop.f32.mrb[0].mxu0
        %1152 = vmatprep.mubr.f32.mxu0 0.0
        %1153 = vmatmul.mubr.f32.gmra.mrb[0].mxu0 %v1071
        %v1154 = vpop.f32.mrb[0].mxu0
        %v1155 = vadd.f32 %v1060, %v1154
        %v1156 = vpop.f32.mrb[0].mxu0
        %1157 = vdwg.mxu0
        %s1158 = scalar_lea.vmem %s344, 96
        %v1159 = vld [vmem:[%s1158] sm:$0xff]
        %v1160 = vld [vmem:[%s1158 + $0x8] sm:$0xff]
        %v1161 = vld [vmem:[%s1158 + $0x10] sm:$0xff]
        %v1162 = vld [vmem:[%s1158 + $0x18] sm:$0xff]
        %1164 = vset.pattern.permute.xlu0 0
        %1165 = vperm.xlu0 %1164, %v1159
        %v1166 = vpop.permute.xlu0 %1165
        %1169 = vset.pattern.permute.xlu0 0
        %1170 = vperm.xlu0 %1169, %v1160
        %v1171 = vpop.permute.xlu0 %1170
        %1174 = vset.pattern.permute.xlu0 0
        %1175 = vperm.xlu0 %1174, %v1161
        %v1176 = vpop.permute.xlu0 %1175
        %1179 = vset.pattern.permute.xlu0 0
        %1180 = vperm.xlu0 %1179, %v1162
        %v1181 = vpop.permute.xlu0 %1180
        %v1183 = vadd.f32 %v1140, %v1166
        %v1184 = vadd.f32 %v1145, %v1171
        %v1185 = vadd.f32 %v1150, %v1176
        %v1186 = vadd.f32 %v1155, %v1181
        %v1187 = vmax.f32 %v1183, 0.0
        %v1188 = vmax.f32 %v1184, 0.0
        %v1189 = vmax.f32 %v1185, 0.0
        %v1190 = vmax.f32 %v1186, 0.0
        %v1191 = vld [vmem:[%s4] sm:$0x1]
        %s1192 = sld [smem:[#allocation3]]
        %v1193 = vstv %s1192
        %v1195 = vsel %vm358, %v1191, 0
        %1197 = vmatprep.subr.mxu0 0.0
        %1198 = vmatpush1.msra.mxu0 %v1187
        %1199 = vmatprep.subr.mxu0 0.0
        %1200 = vmatpush1.msra.mxu0 %v1188
        %1201 = vmatprep.subr.mxu0 0.0
        %1202 = vmatpush1.msra.mxu0 %v1189
        %1203 = vmatprep.subr.mxu0 0.0
        %1204 = vmatpush1.msra.mxu0 %v1190
        %1205 = vmatprep.subr.mxu0 0.0
        %1206 = vmatpush1.msra.mxu0 0.0
        %1207 = vmatprep.subr.mxu0 0.0
        %1208 = vmatpush1.msra.mxu0 0.0
        %1209 = vmatprep.subr.mxu0 0.0
        %1210 = vmatpush1.msra.mxu0 0.0
        %1211 = vmatprep.subr.mxu0 0.0
        %1212 = vmatpush1.msra.mxu0 0.0
        %1213 = vmatprep.subr.mxu0 0.0
        %1214 = vmatpush1.msra.mxu0 0.0
        %1215 = vmatprep.subr.mxu0 0.0
        %1216 = vmatpush1.msra.mxu0 0.0
        %1217 = vmatprep.subr.mxu0 0.0
        %1218 = vmatpush1.msra.mxu0 0.0
        %1219 = vmatprep.subr.mxu0 0.0
        %1220 = vmatpush1.msra.mxu0 0.0
        %1221 = vmatprep.subr.mxu0 0.0
        %1222 = vmatpush1.msra.mxu0 0.0
        %1223 = vmatprep.subr.mxu0 0.0
        %1224 = vmatpush1.msra.mxu0 0.0
        %1225 = vmatprep.subr.mxu0 0.0
        %1226 = vmatpush1.msra.mxu0 0.0
        %1227 = vmatprep.subr.mxu0 0.0
        %1228 = vmatpush1.msra.mxu0 0.0
        %1229 = vmatprep.subr.mxu0 0.0
        %1230 = vmatpush1.msra.mxu0 0.0
        %1231 = vmatprep.subr.mxu0 0.0
        %1232 = vmatpush1.msra.mxu0 0.0
        %1233 = vmatprep.subr.mxu0 0.0
        %1234 = vmatpush1.msra.mxu0 0.0
        %1235 = vmatprep.subr.mxu0 0.0
        %1236 = vmatpush1.msra.mxu0 0.0
        %1237 = vmatprep.subr.mxu0 0.0
        %1238 = vmatpush1.msra.mxu0 0.0
        %1239 = vmatprep.subr.mxu0 0.0
        %1240 = vmatpush1.msra.mxu0 0.0
        %1241 = vmatprep.subr.mxu0 0.0
        %1242 = vmatpush1.msra.mxu0 0.0
        %1243 = vmatprep.subr.mxu0 0.0
        %1244 = vmatpush1.msra.mxu0 0.0
        %1245 = vmatprep.subr.mxu0 0.0
        %1246 = vmatpush1.msra.mxu0 0.0
        %1247 = vmatprep.subr.mxu0 0.0
        %1248 = vmatpush1.msra.mxu0 0.0
        %1249 = vmatprep.subr.mxu0 0.0
        %1250 = vmatpush1.msra.mxu0 0.0
        %1251 = vmatprep.subr.mxu0 0.0
        %1252 = vmatpush1.msra.mxu0 0.0
        %1253 = vmatprep.subr.mxu0 0.0
        %1254 = vmatpush1.msra.mxu0 0.0
        %1255 = vmatprep.subr.mxu0 0.0
        %1256 = vmatpush1.msra.mxu0 0.0
        %1257 = vmatprep.subr.mxu0 0.0
        %1258 = vmatpush1.msra.mxu0 0.0
        %1259 = vmatprep.subr.mxu0 0.0
        %1260 = vmatpush1.msra.mxu0 0.0
        %1261 = vmatprep.mubr.f32.mxu0 0.0
        %1262 = vmatmul.mubr.f32.gmra.mrb[0].mxu0 %v1195
        %v1263 = vpop.f32.mrb[0].mxu0
        %v1264 = vadd.f32 %v1193, %v1263
        %v1265 = vpop.f32.mrb[0].mxu0
        %1266 = vdwg.mxu0
        %1267 = vst [vmem:[%s331 + $0x3] sm:$0x1] %v1264
        %v1268 = vsel %vm567, %v1264, -1e+30
        %v1269 = vsel %vm569, %v1268, -inf
        %1270 = vmax.xlane.f32.xlu0 %v1269
        %v1271 = vpop.xlane.xlu0 %1270
        %v1272 = vsub.f32 %v1268, %v1271
        %v1273 = vmul.f32 %v1272, 1.442695
        %v1274 = vpow.pop %v1273
        %v1275 = vsel %vm569, %v1274, 0.0
        %1276 = vadd.xlane.f32.xlu0 %v1275
        %v1277 = vpop.xlane.xlu0 %1276
        %v1278 = vrcp.pop %v1277
        %v1279 = vmul.f32 %v1274, %v1278
        %1280 = vst [vmem:[#allocation2 + $0x3] sm:$0x1] %v1279
        %s1281 = scalar_lea.vmem %s337, 128
        %v1282 = vld [vmem:[%s1281] sm:$0xff]
        %v1283 = vld [vmem:[%s1281 + $0x8] sm:$0xff]
        %v1284 = vld [vmem:[%s1281 + $0x10] sm:$0xff]
        %v1285 = vld [vmem:[%s1281 + $0x18] sm:$0xff]
        %v1286 = vld [vmem:[%s3] sm:$0xff]
        %v1287 = vld [vmem:[%s3 + $0x8] sm:$0xff]
        %v1288 = vld [vmem:[%s3 + $0x10] sm:$0xff]
        %v1289 = vld [vmem:[%s3 + $0x18] sm:$0xff]
        %v1290 = vld [vmem:[%s2] sm:$0xff]
        %v1291 = vld [vmem:[%s2 + $0x8] sm:$0xff]
        %v1292 = vld [vmem:[%s2 + $0x10] sm:$0xff]
        %v1293 = vld [vmem:[%s2 + $0x18] sm:$0xff]
        %v1295 = vsel %vm358, %v1286, 0
        %v1298 = vsel %vm358, %v1287, 0
        %v1301 = vsel %vm358, %v1288, 0
        %v1304 = vsel %vm358, %v1289, 0
        %1306 = vmatprep.subr.mxu0 0.0
        %1307 = vmatpush1.msra.mxu0 %v1282
        %1308 = vmatprep.subr.mxu0 0.0
        %1309 = vmatpush1.msra.mxu0 %v1283
        %1310 = vmatprep.subr.mxu0 0.0
        %1311 = vmatpush1.msra.mxu0 %v1284
        %1312 = vmatprep.subr.mxu0 0.0
        %1313 = vmatpush1.msra.mxu0 %v1285
        %1314 = vmatprep.subr.mxu0 0.0
        %1315 = vmatpush1.msra.mxu0 0.0
        %1316 = vmatprep.subr.mxu0 0.0
        %1317 = vmatpush1.msra.mxu0 0.0
        %1318 = vmatprep.subr.mxu0 0.0
        %1319 = vmatpush1.msra.mxu0 0.0
        %1320 = vmatprep.subr.mxu0 0.0
        %1321 = vmatpush1.msra.mxu0 0.0
        %1322 = vmatprep.subr.mxu0 0.0
        %1323 = vmatpush1.msra.mxu0 0.0
        %1324 = vmatprep.subr.mxu0 0.0
        %1325 = vmatpush1.msra.mxu0 0.0
        %1326 = vmatprep.subr.mxu0 0.0
        %1327 = vmatpush1.msra.mxu0 0.0
        %1328 = vmatprep.subr.mxu0 0.0
        %1329 = vmatpush1.msra.mxu0 0.0
        %1330 = vmatprep.subr.mxu0 0.0
        %1331 = vmatpush1.msra.mxu0 0.0
        %1332 = vmatprep.subr.mxu0 0.0
        %1333 = vmatpush1.msra.mxu0 0.0
        %1334 = vmatprep.subr.mxu0 0.0
        %1335 = vmatpush1.msra.mxu0 0.0
        %1336 = vmatprep.subr.mxu0 0.0
        %1337 = vmatpush1.msra.mxu0 0.0
        %1338 = vmatprep.subr.mxu0 0.0
        %1339 = vmatpush1.msra.mxu0 0.0
        %1340 = vmatprep.subr.mxu0 0.0
        %1341 = vmatpush1.msra.mxu0 0.0
        %1342 = vmatprep.subr.mxu0 0.0
        %1343 = vmatpush1.msra.mxu0 0.0
        %1344 = vmatprep.subr.mxu0 0.0
        %1345 = vmatpush1.msra.mxu0 0.0
        %1346 = vmatprep.subr.mxu0 0.0
        %1347 = vmatpush1.msra.mxu0 0.0
        %1348 = vmatprep.subr.mxu0 0.0
        %1349 = vmatpush1.msra.mxu0 0.0
        %1350 = vmatprep.subr.mxu0 0.0
        %1351 = vmatpush1.msra.mxu0 0.0
        %1352 = vmatprep.subr.mxu0 0.0
        %1353 = vmatpush1.msra.mxu0 0.0
        %1354 = vmatprep.subr.mxu0 0.0
        %1355 = vmatpush1.msra.mxu0 0.0
        %1356 = vmatprep.subr.mxu0 0.0
        %1357 = vmatpush1.msra.mxu0 0.0
        %1358 = vmatprep.subr.mxu0 0.0
        %1359 = vmatpush1.msra.mxu0 0.0
        %1360 = vmatprep.subr.mxu0 0.0
        %1361 = vmatpush1.msra.mxu0 0.0
        %1362 = vmatprep.subr.mxu0 0.0
        %1363 = vmatpush1.msra.mxu0 0.0
        %1364 = vmatprep.subr.mxu0 0.0
        %1365 = vmatpush1.msra.mxu0 0.0
        %1366 = vmatprep.subr.mxu0 0.0
        %1367 = vmatpush1.msra.mxu0 0.0
        %1368 = vmatprep.subr.mxu0 0.0
        %1369 = vmatpush1.msra.mxu0 0.0
        %1370 = vmatprep.mubr.f32.mxu0 0.0
        %1371 = vmatmul.mubr.f32.gmra.mrb[0].mxu0 %v1295
        %v1372 = vpop.f32.mrb[0].mxu0
        %v1373 = vadd.f32 %v1290, %v1372
        %v1374 = vpop.f32.mrb[0].mxu0
        %1375 = vmatprep.mubr.f32.mxu0 0.0
        %1376 = vmatmul.mubr.f32.gmra.mrb[0].mxu0 %v1298
        %v1377 = vpop.f32.mrb[0].mxu0
        %v1378 = vadd.f32 %v1291, %v1377
        %v1379 = vpop.f32.mrb[0].mxu0
        %1380 = vmatprep.mubr.f32.mxu0 0.0
        %1381 = vmatmul.mubr.f32.gmra.mrb[0].mxu0 %v1301
        %v1382 = vpop.f32.mrb[0].mxu0
        %v1383 = vadd.f32 %v1292, %v1382
        %v1384 = vpop.f32.mrb[0].mxu0
        %1385 = vmatprep.mubr.f32.mxu0 0.0
        %1386 = vmatmul.mubr.f32.gmra.mrb[0].mxu0 %v1304
        %v1387 = vpop.f32.mrb[0].mxu0
        %v1388 = vadd.f32 %v1293, %v1387
        %v1389 = vpop.f32.mrb[0].mxu0
        %1390 = vdwg.mxu0
        %s1391 = scalar_lea.vmem %s344, 128
        %v1392 = vld [vmem:[%s1391] sm:$0xff]
        %v1393 = vld [vmem:[%s1391 + $0x8] sm:$0xff]
        %v1394 = vld [vmem:[%s1391 + $0x10] sm:$0xff]
        %v1395 = vld [vmem:[%s1391 + $0x18] sm:$0xff]
        %1397 = vset.pattern.permute.xlu0 0
        %1398 = vperm.xlu0 %1397, %v1392
        %v1399 = vpop.permute.xlu0 %1398
        %1402 = vset.pattern.permute.xlu0 0
        %1403 = vperm.xlu0 %1402, %v1393
        %v1404 = vpop.permute.xlu0 %1403
        %1407 = vset.pattern.permute.xlu0 0
        %1408 = vperm.xlu0 %1407, %v1394
        %v1409 = vpop.permute.xlu0 %1408
        %1412 = vset.pattern.permute.xlu0 0
        %1413 = vperm.xlu0 %1412, %v1395
        %v1414 = vpop.permute.xlu0 %1413
        %v1416 = vadd.f32 %v1373, %v1399
        %v1417 = vadd.f32 %v1378, %v1404
        %v1418 = vadd.f32 %v1383, %v1409
        %v1419 = vadd.f32 %v1388, %v1414
        %v1420 = vmax.f32 %v1416, 0.0
        %v1421 = vmax.f32 %v1417, 0.0
        %v1422 = vmax.f32 %v1418, 0.0
        %v1423 = vmax.f32 %v1419, 0.0
        %v1424 = vld [vmem:[%s4] sm:$0x1]
        %s1425 = sld [smem:[#allocation3]]
        %v1426 = vstv %s1425
        %v1428 = vsel %vm358, %v1424, 0
        %1430 = vmatprep.subr.mxu0 0.0
        %1431 = vmatpush1.msra.mxu0 %v1420
        %1432 = vmatprep.subr.mxu0 0.0
        %1433 = vmatpush1.msra.mxu0 %v1421
        %1434 = vmatprep.subr.mxu0 0.0
        %1435 = vmatpush1.msra.mxu0 %v1422
        %1436 = vmatprep.subr.mxu0 0.0
        %1437 = vmatpush1.msra.mxu0 %v1423
        %1438 = vmatprep.subr.mxu0 0.0
        %1439 = vmatpush1.msra.mxu0 0.0
        %1440 = vmatprep.subr.mxu0 0.0
        %1441 = vmatpush1.msra.mxu0 0.0
        %1442 = vmatprep.subr.mxu0 0.0
        %1443 = vmatpush1.msra.mxu0 0.0
        %1444 = vmatprep.subr.mxu0 0.0
        %1445 = vmatpush1.msra.mxu0 0.0
        %1446 = vmatprep.subr.mxu0 0.0
        %1447 = vmatpush1.msra.mxu0 0.0
        %1448 = vmatprep.subr.mxu0 0.0
        %1449 = vmatpush1.msra.mxu0 0.0
        %1450 = vmatprep.subr.mxu0 0.0
        %1451 = vmatpush1.msra.mxu0 0.0
        %1452 = vmatprep.subr.mxu0 0.0
        %1453 = vmatpush1.msra.mxu0 0.0
        %1454 = vmatprep.subr.mxu0 0.0
        %1455 = vmatpush1.msra.mxu0 0.0
        %1456 = vmatprep.subr.mxu0 0.0
        %1457 = vmatpush1.msra.mxu0 0.0
        %1458 = vmatprep.subr.mxu0 0.0
        %1459 = vmatpush1.msra.mxu0 0.0
        %1460 = vmatprep.subr.mxu0 0.0
        %1461 = vmatpush1.msra.mxu0 0.0
        %1462 = vmatprep.subr.mxu0 0.0
        %1463 = vmatpush1.msra.mxu0 0.0
        %1464 = vmatprep.subr.mxu0 0.0
        %1465 = vmatpush1.msra.mxu0 0.0
        %1466 = vmatprep.subr.mxu0 0.0
        %1467 = vmatpush1.msra.mxu0 0.0
        %1468 = vmatprep.subr.mxu0 0.0
        %1469 = vmatpush1.msra.mxu0 0.0
        %1470 = vmatprep.subr.mxu0 0.0
        %1471 = vmatpush1.msra.mxu0 0.0
        %1472 = vmatprep.subr.mxu0 0.0
        %1473 = vmatpush1.msra.mxu0 0.0
        %1474 = vmatprep.subr.mxu0 0.0
        %1475 = vmatpush1.msra.mxu0 0.0
        %1476 = vmatprep.subr.mxu0 0.0
        %1477 = vmatpush1.msra.mxu0 0.0
        %1478 = vmatprep.subr.mxu0 0.0
        %1479 = vmatpush1.msra.mxu0 0.0
        %1480 = vmatprep.subr.mxu0 0.0
        %1481 = vmatpush1.msra.mxu0 0.0
        %1482 = vmatprep.subr.mxu0 0.0
        %1483 = vmatpush1.msra.mxu0 0.0
        %1484 = vmatprep.subr.mxu0 0.0
        %1485 = vmatpush1.msra.mxu0 0.0
        %1486 = vmatprep.subr.mxu0 0.0
        %1487 = vmatpush1.msra.mxu0 0.0
        %1488 = vmatprep.subr.mxu0 0.0
        %1489 = vmatpush1.msra.mxu0 0.0
        %1490 = vmatprep.subr.mxu0 0.0
        %1491 = vmatpush1.msra.mxu0 0.0
        %1492 = vmatprep.subr.mxu0 0.0
        %1493 = vmatpush1.msra.mxu0 0.0
        %1494 = vmatprep.mubr.f32.mxu0 0.0
        %1495 = vmatmul.mubr.f32.gmra.mrb[0].mxu0 %v1428
        %v1496 = vpop.f32.mrb[0].mxu0
        %v1497 = vadd.f32 %v1426, %v1496
        %v1498 = vpop.f32.mrb[0].mxu0
        %1499 = vdwg.mxu0
        %1500 = vst [vmem:[%s331 + $0x4] sm:$0x1] %v1497
        %v1501 = vsel %vm567, %v1497, -1e+30
        %v1502 = vsel %vm569, %v1501, -inf
        %1503 = vmax.xlane.f32.xlu0 %v1502
        %v1504 = vpop.xlane.xlu0 %1503
        %v1505 = vsub.f32 %v1501, %v1504
        %v1506 = vmul.f32 %v1505, 1.442695
        %v1507 = vpow.pop %v1506
        %v1508 = vsel %vm569, %v1507, 0.0
        %1509 = vadd.xlane.f32.xlu0 %v1508
        %v1510 = vpop.xlane.xlu0 %1509
        %v1511 = vrcp.pop %v1510
        %v1512 = vmul.f32 %v1507, %v1511
        %1513 = vst [vmem:[#allocation2 + $0x4] sm:$0x1] %v1512
        %s1514 = scalar_lea.vmem %s337, 160
        %v1515 = vld [vmem:[%s1514] sm:$0xff]
        %v1516 = vld [vmem:[%s1514 + $0x8] sm:$0xff]
        %v1517 = vld [vmem:[%s1514 + $0x10] sm:$0xff]
        %v1518 = vld [vmem:[%s1514 + $0x18] sm:$0xff]
        %v1519 = vld [vmem:[%s3] sm:$0xff]
        %v1520 = vld [vmem:[%s3 + $0x8] sm:$0xff]
        %v1521 = vld [vmem:[%s3 + $0x10] sm:$0xff]
        %v1522 = vld [vmem:[%s3 + $0x18] sm:$0xff]
        %v1523 = vld [vmem:[%s2] sm:$0xff]
        %v1524 = vld [vmem:[%s2 + $0x8] sm:$0xff]
        %v1525 = vld [vmem:[%s2 + $0x10] sm:$0xff]
        %v1526 = vld [vmem:[%s2 + $0x18] sm:$0xff]
        %v1528 = vsel %vm358, %v1519, 0
        %v1531 = vsel %vm358, %v1520, 0
        %v1534 = vsel %vm358, %v1521, 0
        %v1537 = vsel %vm358, %v1522, 0
        %1539 = vmatprep.subr.mxu0 0.0
        %1540 = vmatpush1.msra.mxu0 %v1515
        %1541 = vmatprep.subr.mxu0 0.0
        %1542 = vmatpush1.msra.mxu0 %v1516
        %1543 = vmatprep.subr.mxu0 0.0
        %1544 = vmatpush1.msra.mxu0 %v1517
        %1545 = vmatprep.subr.mxu0 0.0
        %1546 = vmatpush1.msra.mxu0 %v1518
        %1547 = vmatprep.subr.mxu0 0.0
        %1548 = vmatpush1.msra.mxu0 0.0
        %1549 = vmatprep.subr.mxu0 0.0
        %1550 = vmatpush1.msra.mxu0 0.0
        %1551 = vmatprep.subr.mxu0 0.0
        %1552 = vmatpush1.msra.mxu0 0.0
        %1553 = vmatprep.subr.mxu0 0.0
        %1554 = vmatpush1.msra.mxu0 0.0
        %1555 = vmatprep.subr.mxu0 0.0
        %1556 = vmatpush1.msra.mxu0 0.0
        %1557 = vmatprep.subr.mxu0 0.0
        %1558 = vmatpush1.msra.mxu0 0.0
        %1559 = vmatprep.subr.mxu0 0.0
        %1560 = vmatpush1.msra.mxu0 0.0
        %1561 = vmatprep.subr.mxu0 0.0
        %1562 = vmatpush1.msra.mxu0 0.0
        %1563 = vmatprep.subr.mxu0 0.0
        %1564 = vmatpush1.msra.mxu0 0.0
        %1565 = vmatprep.subr.mxu0 0.0
        %1566 = vmatpush1.msra.mxu0 0.0
        %1567 = vmatprep.subr.mxu0 0.0
        %1568 = vmatpush1.msra.mxu0 0.0
        %1569 = vmatprep.subr.mxu0 0.0
        %1570 = vmatpush1.msra.mxu0 0.0
        %1571 = vmatprep.subr.mxu0 0.0
        %1572 = vmatpush1.msra.mxu0 0.0
        %1573 = vmatprep.subr.mxu0 0.0
        %1574 = vmatpush1.msra.mxu0 0.0
        %1575 = vmatprep.subr.mxu0 0.0
        %1576 = vmatpush1.msra.mxu0 0.0
        %1577 = vmatprep.subr.mxu0 0.0
        %1578 = vmatpush1.msra.mxu0 0.0
        %1579 = vmatprep.subr.mxu0 0.0
        %1580 = vmatpush1.msra.mxu0 0.0
        %1581 = vmatprep.subr.mxu0 0.0
        %1582 = vmatpush1.msra.mxu0 0.0
        %1583 = vmatprep.subr.mxu0 0.0
        %1584 = vmatpush1.msra.mxu0 0.0
        %1585 = vmatprep.subr.mxu0 0.0
        %1586 = vmatpush1.msra.mxu0 0.0
        %1587 = vmatprep.subr.mxu0 0.0
        %1588 = vmatpush1.msra.mxu0 0.0
        %1589 = vmatprep.subr.mxu0 0.0
        %1590 = vmatpush1.msra.mxu0 0.0
        %1591 = vmatprep.subr.mxu0 0.0
        %1592 = vmatpush1.msra.mxu0 0.0
        %1593 = vmatprep.subr.mxu0 0.0
        %1594 = vmatpush1.msra.mxu0 0.0
        %1595 = vmatprep.subr.mxu0 0.0
        %1596 = vmatpush1.msra.mxu0 0.0
        %1597 = vmatprep.subr.mxu0 0.0
        %1598 = vmatpush1.msra.mxu0 0.0
        %1599 = vmatprep.subr.mxu0 0.0
        %1600 = vmatpush1.msra.mxu0 0.0
        %1601 = vmatprep.subr.mxu0 0.0
        %1602 = vmatpush1.msra.mxu0 0.0
        %1603 = vmatprep.mubr.f32.mxu0 0.0
        %1604 = vmatmul.mubr.f32.gmra.mrb[0].mxu0 %v1528
        %v1605 = vpop.f32.mrb[0].mxu0
        %v1606 = vadd.f32 %v1523, %v1605
        %v1607 = vpop.f32.mrb[0].mxu0
        %1608 = vmatprep.mubr.f32.mxu0 0.0
        %1609 = vmatmul.mubr.f32.gmra.mrb[0].mxu0 %v1531
        %v1610 = vpop.f32.mrb[0].mxu0
        %v1611 = vadd.f32 %v1524, %v1610
        %v1612 = vpop.f32.mrb[0].mxu0
        %1613 = vmatprep.mubr.f32.mxu0 0.0
        %1614 = vmatmul.mubr.f32.gmra.mrb[0].mxu0 %v1534
        %v1615 = vpop.f32.mrb[0].mxu0
        %v1616 = vadd.f32 %v1525, %v1615
        %v1617 = vpop.f32.mrb[0].mxu0
        %1618 = vmatprep.mubr.f32.mxu0 0.0
        %1619 = vmatmul.mubr.f32.gmra.mrb[0].mxu0 %v1537
        %v1620 = vpop.f32.mrb[0].mxu0
        %v1621 = vadd.f32 %v1526, %v1620
        %v1622 = vpop.f32.mrb[0].mxu0
        %1623 = vdwg.mxu0
        %s1624 = scalar_lea.vmem %s344, 160
        %v1625 = vld [vmem:[%s1624] sm:$0xff]
        %v1626 = vld [vmem:[%s1624 + $0x8] sm:$0xff]
        %v1627 = vld [vmem:[%s1624 + $0x10] sm:$0xff]
        %v1628 = vld [vmem:[%s1624 + $0x18] sm:$0xff]
        %1630 = vset.pattern.permute.xlu0 0
        %1631 = vperm.xlu0 %1630, %v1625
        %v1632 = vpop.permute.xlu0 %1631
        %1635 = vset.pattern.permute.xlu0 0
        %1636 = vperm.xlu0 %1635, %v1626
        %v1637 = vpop.permute.xlu0 %1636
        %1640 = vset.pattern.permute.xlu0 0
        %1641 = vperm.xlu0 %1640, %v1627
        %v1642 = vpop.permute.xlu0 %1641
        %1645 = vset.pattern.permute.xlu0 0
        %1646 = vperm.xlu0 %1645, %v1628
        %v1647 = vpop.permute.xlu0 %1646
        %v1649 = vadd.f32 %v1606, %v1632
        %v1650 = vadd.f32 %v1611, %v1637
        %v1651 = vadd.f32 %v1616, %v1642
        %v1652 = vadd.f32 %v1621, %v1647
        %v1653 = vmax.f32 %v1649, 0.0
        %v1654 = vmax.f32 %v1650, 0.0
        %v1655 = vmax.f32 %v1651, 0.0
        %v1656 = vmax.f32 %v1652, 0.0
        %v1657 = vld [vmem:[%s4] sm:$0x1]
        %s1658 = sld [smem:[#allocation3]]
        %v1659 = vstv %s1658
        %v1661 = vsel %vm358, %v1657, 0
        %1663 = vmatprep.subr.mxu0 0.0
        %1664 = vmatpush1.msra.mxu0 %v1653
        %1665 = vmatprep.subr.mxu0 0.0
        %1666 = vmatpush1.msra.mxu0 %v1654
        %1667 = vmatprep.subr.mxu0 0.0
        %1668 = vmatpush1.msra.mxu0 %v1655
        %1669 = vmatprep.subr.mxu0 0.0
        %1670 = vmatpush1.msra.mxu0 %v1656
        %1671 = vmatprep.subr.mxu0 0.0
        %1672 = vmatpush1.msra.mxu0 0.0
        %1673 = vmatprep.subr.mxu0 0.0
        %1674 = vmatpush1.msra.mxu0 0.0
        %1675 = vmatprep.subr.mxu0 0.0
        %1676 = vmatpush1.msra.mxu0 0.0
        %1677 = vmatprep.subr.mxu0 0.0
        %1678 = vmatpush1.msra.mxu0 0.0
        %1679 = vmatprep.subr.mxu0 0.0
        %1680 = vmatpush1.msra.mxu0 0.0
        %1681 = vmatprep.subr.mxu0 0.0
        %1682 = vmatpush1.msra.mxu0 0.0
        %1683 = vmatprep.subr.mxu0 0.0
        %1684 = vmatpush1.msra.mxu0 0.0
        %1685 = vmatprep.subr.mxu0 0.0
        %1686 = vmatpush1.msra.mxu0 0.0
        %1687 = vmatprep.subr.mxu0 0.0
        %1688 = vmatpush1.msra.mxu0 0.0
        %1689 = vmatprep.subr.mxu0 0.0
        %1690 = vmatpush1.msra.mxu0 0.0
        %1691 = vmatprep.subr.mxu0 0.0
        %1692 = vmatpush1.msra.mxu0 0.0
        %1693 = vmatprep.subr.mxu0 0.0
        %1694 = vmatpush1.msra.mxu0 0.0
        %1695 = vmatprep.subr.mxu0 0.0
        %1696 = vmatpush1.msra.mxu0 0.0
        %1697 = vmatprep.subr.mxu0 0.0
        %1698 = vmatpush1.msra.mxu0 0.0
        %1699 = vmatprep.subr.mxu0 0.0
        %1700 = vmatpush1.msra.mxu0 0.0
        %1701 = vmatprep.subr.mxu0 0.0
        %1702 = vmatpush1.msra.mxu0 0.0
        %1703 = vmatprep.subr.mxu0 0.0
        %1704 = vmatpush1.msra.mxu0 0.0
        %1705 = vmatprep.subr.mxu0 0.0
        %1706 = vmatpush1.msra.mxu0 0.0
        %1707 = vmatprep.subr.mxu0 0.0
        %1708 = vmatpush1.msra.mxu0 0.0
        %1709 = vmatprep.subr.mxu0 0.0
        %1710 = vmatpush1.msra.mxu0 0.0
        %1711 = vmatprep.subr.mxu0 0.0
        %1712 = vmatpush1.msra.mxu0 0.0
        %1713 = vmatprep.subr.mxu0 0.0
        %1714 = vmatpush1.msra.mxu0 0.0
        %1715 = vmatprep.subr.mxu0 0.0
        %1716 = vmatpush1.msra.mxu0 0.0
        %1717 = vmatprep.subr.mxu0 0.0
        %1718 = vmatpush1.msra.mxu0 0.0
        %1719 = vmatprep.subr.mxu0 0.0
        %1720 = vmatpush1.msra.mxu0 0.0
        %1721 = vmatprep.subr.mxu0 0.0
        %1722 = vmatpush1.msra.mxu0 0.0
        %1723 = vmatprep.subr.mxu0 0.0
        %1724 = vmatpush1.msra.mxu0 0.0
        %1725 = vmatprep.subr.mxu0 0.0
        %1726 = vmatpush1.msra.mxu0 0.0
        %1727 = vmatprep.mubr.f32.mxu0 0.0
        %1728 = vmatmul.mubr.f32.gmra.mrb[0].mxu0 %v1661
        %v1729 = vpop.f32.mrb[0].mxu0
        %v1730 = vadd.f32 %v1659, %v1729
        %v1731 = vpop.f32.mrb[0].mxu0
        %1732 = vdwg.mxu0
        %1733 = vst [vmem:[%s331 + $0x5] sm:$0x1] %v1730
        %v1734 = vsel %vm567, %v1730, -1e+30
        %v1735 = vsel %vm569, %v1734, -inf
        %1736 = vmax.xlane.f32.xlu0 %v1735
        %v1737 = vpop.xlane.xlu0 %1736
        %v1738 = vsub.f32 %v1734, %v1737
        %v1739 = vmul.f32 %v1738, 1.442695
        %v1740 = vpow.pop %v1739
        %v1741 = vsel %vm569, %v1740, 0.0
        %1742 = vadd.xlane.f32.xlu0 %v1741
        %v1743 = vpop.xlane.xlu0 %1742
        %v1744 = vrcp.pop %v1743
        %v1745 = vmul.f32 %v1740, %v1744
        %1746 = vst [vmem:[#allocation2 + $0x5] sm:$0x1] %v1745
        %s1747 = scalar_lea.vmem %s337, 192
        %v1748 = vld [vmem:[%s1747] sm:$0xff]
        %v1749 = vld [vmem:[%s1747 + $0x8] sm:$0xff]
        %v1750 = vld [vmem:[%s1747 + $0x10] sm:$0xff]
        %v1751 = vld [vmem:[%s1747 + $0x18] sm:$0xff]
        %v1752 = vld [vmem:[%s3] sm:$0xff]
        %v1753 = vld [vmem:[%s3 + $0x8] sm:$0xff]
        %v1754 = vld [vmem:[%s3 + $0x10] sm:$0xff]
        %v1755 = vld [vmem:[%s3 + $0x18] sm:$0xff]
        %v1756 = vld [vmem:[%s2] sm:$0xff]
        %v1757 = vld [vmem:[%s2 + $0x8] sm:$0xff]
        %v1758 = vld [vmem:[%s2 + $0x10] sm:$0xff]
        %v1759 = vld [vmem:[%s2 + $0x18] sm:$0xff]
        %v1761 = vsel %vm358, %v1752, 0
        %v1764 = vsel %vm358, %v1753, 0
        %v1767 = vsel %vm358, %v1754, 0
        %v1770 = vsel %vm358, %v1755, 0
        %1772 = vmatprep.subr.mxu0 0.0
        %1773 = vmatpush1.msra.mxu0 %v1748
        %1774 = vmatprep.subr.mxu0 0.0
        %1775 = vmatpush1.msra.mxu0 %v1749
        %1776 = vmatprep.subr.mxu0 0.0
        %1777 = vmatpush1.msra.mxu0 %v1750
        %1778 = vmatprep.subr.mxu0 0.0
        %1779 = vmatpush1.msra.mxu0 %v1751
        %1780 = vmatprep.subr.mxu0 0.0
        %1781 = vmatpush1.msra.mxu0 0.0
        %1782 = vmatprep.subr.mxu0 0.0
        %1783 = vmatpush1.msra.mxu0 0.0
        %1784 = vmatprep.subr.mxu0 0.0
        %1785 = vmatpush1.msra.mxu0 0.0
        %1786 = vmatprep.subr.mxu0 0.0
        %1787 = vmatpush1.msra.mxu0 0.0
        %1788 = vmatprep.subr.mxu0 0.0
        %1789 = vmatpush1.msra.mxu0 0.0
        %1790 = vmatprep.subr.mxu0 0.0
        %1791 = vmatpush1.msra.mxu0 0.0
        %1792 = vmatprep.subr.mxu0 0.0
        %1793 = vmatpush1.msra.mxu0 0.0
        %1794 = vmatprep.subr.mxu0 0.0
        %1795 = vmatpush1.msra.mxu0 0.0
        %1796 = vmatprep.subr.mxu0 0.0
        %1797 = vmatpush1.msra.mxu0 0.0
        %1798 = vmatprep.subr.mxu0 0.0
        %1799 = vmatpush1.msra.mxu0 0.0
        %1800 = vmatprep.subr.mxu0 0.0
        %1801 = vmatpush1.msra.mxu0 0.0
        %1802 = vmatprep.subr.mxu0 0.0
        %1803 = vmatpush1.msra.mxu0 0.0
        %1804 = vmatprep.subr.mxu0 0.0
        %1805 = vmatpush1.msra.mxu0 0.0
        %1806 = vmatprep.subr.mxu0 0.0
        %1807 = vmatpush1.msra.mxu0 0.0
        %1808 = vmatprep.subr.mxu0 0.0
        %1809 = vmatpush1.msra.mxu0 0.0
        %1810 = vmatprep.subr.mxu0 0.0
        %1811 = vmatpush1.msra.mxu0 0.0
        %1812 = vmatprep.subr.mxu0 0.0
        %1813 = vmatpush1.msra.mxu0 0.0
        %1814 = vmatprep.subr.mxu0 0.0
        %1815 = vmatpush1.msra.mxu0 0.0
        %1816 = vmatprep.subr.mxu0 0.0
        %1817 = vmatpush1.msra.mxu0 0.0
        %1818 = vmatprep.subr.mxu0 0.0
        %1819 = vmatpush1.msra.mxu0 0.0
        %1820 = vmatprep.subr.mxu0 0.0
        %1821 = vmatpush1.msra.mxu0 0.0
        %1822 = vmatprep.subr.mxu0 0.0
        %1823 = vmatpush1.msra.mxu0 0.0
        %1824 = vmatprep.subr.mxu0 0.0
        %1825 = vmatpush1.msra.mxu0 0.0
        %1826 = vmatprep.subr.mxu0 0.0
        %1827 = vmatpush1.msra.mxu0 0.0
        %1828 = vmatprep.subr.mxu0 0.0
        %1829 = vmatpush1.msra.mxu0 0.0
        %1830 = vmatprep.subr.mxu0 0.0
        %1831 = vmatpush1.msra.mxu0 0.0
        %1832 = vmatprep.subr.mxu0 0.0
        %1833 = vmatpush1.msra.mxu0 0.0
        %1834 = vmatprep.subr.mxu0 0.0
        %1835 = vmatpush1.msra.mxu0 0.0
        %1836 = vmatprep.mubr.f32.mxu0 0.0
        %1837 = vmatmul.mubr.f32.gmra.mrb[0].mxu0 %v1761
        %v1838 = vpop.f32.mrb[0].mxu0
        %v1839 = vadd.f32 %v1756, %v1838
        %v1840 = vpop.f32.mrb[0].mxu0
        %1841 = vmatprep.mubr.f32.mxu0 0.0
        %1842 = vmatmul.mubr.f32.gmra.mrb[0].mxu0 %v1764
        %v1843 = vpop.f32.mrb[0].mxu0
        %v1844 = vadd.f32 %v1757, %v1843
        %v1845 = vpop.f32.mrb[0].mxu0
        %1846 = vmatprep.mubr.f32.mxu0 0.0
        %1847 = vmatmul.mubr.f32.gmra.mrb[0].mxu0 %v1767
        %v1848 = vpop.f32.mrb[0].mxu0
        %v1849 = vadd.f32 %v1758, %v1848
        %v1850 = vpop.f32.mrb[0].mxu0
        %1851 = vmatprep.mubr.f32.mxu0 0.0
        %1852 = vmatmul.mubr.f32.gmra.mrb[0].mxu0 %v1770
        %v1853 = vpop.f32.mrb[0].mxu0
        %v1854 = vadd.f32 %v1759, %v1853
        %v1855 = vpop.f32.mrb[0].mxu0
        %1856 = vdwg.mxu0
        %s1857 = scalar_lea.vmem %s344, 192
        %v1858 = vld [vmem:[%s1857] sm:$0xff]
        %v1859 = vld [vmem:[%s1857 + $0x8] sm:$0xff]
        %v1860 = vld [vmem:[%s1857 + $0x10] sm:$0xff]
        %v1861 = vld [vmem:[%s1857 + $0x18] sm:$0xff]
        %1863 = vset.pattern.permute.xlu0 0
        %1864 = vperm.xlu0 %1863, %v1858
        %v1865 = vpop.permute.xlu0 %1864
        %1868 = vset.pattern.permute.xlu0 0
        %1869 = vperm.xlu0 %1868, %v1859
        %v1870 = vpop.permute.xlu0 %1869
        %1873 = vset.pattern.permute.xlu0 0
        %1874 = vperm.xlu0 %1873, %v1860
        %v1875 = vpop.permute.xlu0 %1874
        %1878 = vset.pattern.permute.xlu0 0
        %1879 = vperm.xlu0 %1878, %v1861
        %v1880 = vpop.permute.xlu0 %1879
        %v1882 = vadd.f32 %v1839, %v1865
        %v1883 = vadd.f32 %v1844, %v1870
        %v1884 = vadd.f32 %v1849, %v1875
        %v1885 = vadd.f32 %v1854, %v1880
        %v1886 = vmax.f32 %v1882, 0.0
        %v1887 = vmax.f32 %v1883, 0.0
        %v1888 = vmax.f32 %v1884, 0.0
        %v1889 = vmax.f32 %v1885, 0.0
        %v1890 = vld [vmem:[%s4] sm:$0x1]
        %s1891 = sld [smem:[#allocation3]]
        %v1892 = vstv %s1891
        %v1894 = vsel %vm358, %v1890, 0
        %1896 = vmatprep.subr.mxu0 0.0
        %1897 = vmatpush1.msra.mxu0 %v1886
        %1898 = vmatprep.subr.mxu0 0.0
        %1899 = vmatpush1.msra.mxu0 %v1887
        %1900 = vmatprep.subr.mxu0 0.0
        %1901 = vmatpush1.msra.mxu0 %v1888
        %1902 = vmatprep.subr.mxu0 0.0
        %1903 = vmatpush1.msra.mxu0 %v1889
        %1904 = vmatprep.subr.mxu0 0.0
        %1905 = vmatpush1.msra.mxu0 0.0
        %1906 = vmatprep.subr.mxu0 0.0
        %1907 = vmatpush1.msra.mxu0 0.0
        %1908 = vmatprep.subr.mxu0 0.0
        %1909 = vmatpush1.msra.mxu0 0.0
        %1910 = vmatprep.subr.mxu0 0.0
        %1911 = vmatpush1.msra.mxu0 0.0
        %1912 = vmatprep.subr.mxu0 0.0
        %1913 = vmatpush1.msra.mxu0 0.0
        %1914 = vmatprep.subr.mxu0 0.0
        %1915 = vmatpush1.msra.mxu0 0.0
        %1916 = vmatprep.subr.mxu0 0.0
        %1917 = vmatpush1.msra.mxu0 0.0
        %1918 = vmatprep.subr.mxu0 0.0
        %1919 = vmatpush1.msra.mxu0 0.0
        %1920 = vmatprep.subr.mxu0 0.0
        %1921 = vmatpush1.msra.mxu0 0.0
        %1922 = vmatprep.subr.mxu0 0.0
        %1923 = vmatpush1.msra.mxu0 0.0
        %1924 = vmatprep.subr.mxu0 0.0
        %1925 = vmatpush1.msra.mxu0 0.0
        %1926 = vmatprep.subr.mxu0 0.0
        %1927 = vmatpush1.msra.mxu0 0.0
        %1928 = vmatprep.subr.mxu0 0.0
        %1929 = vmatpush1.msra.mxu0 0.0
        %1930 = vmatprep.subr.mxu0 0.0
        %1931 = vmatpush1.msra.mxu0 0.0
        %1932 = vmatprep.subr.mxu0 0.0
        %1933 = vmatpush1.msra.mxu0 0.0
        %1934 = vmatprep.subr.mxu0 0.0
        %1935 = vmatpush1.msra.mxu0 0.0
        %1936 = vmatprep.subr.mxu0 0.0
        %1937 = vmatpush1.msra.mxu0 0.0
        %1938 = vmatprep.subr.mxu0 0.0
        %1939 = vmatpush1.msra.mxu0 0.0
        %1940 = vmatprep.subr.mxu0 0.0
        %1941 = vmatpush1.msra.mxu0 0.0
        %1942 = vmatprep.subr.mxu0 0.0
        %1943 = vmatpush1.msra.mxu0 0.0
        %1944 = vmatprep.subr.mxu0 0.0
        %1945 = vmatpush1.msra.mxu0 0.0
        %1946 = vmatprep.subr.mxu0 0.0
        %1947 = vmatpush1.msra.mxu0 0.0
        %1948 = vmatprep.subr.mxu0 0.0
        %1949 = vmatpush1.msra.mxu0 0.0
        %1950 = vmatprep.subr.mxu0 0.0
        %1951 = vmatpush1.msra.mxu0 0.0
        %1952 = vmatprep.subr.mxu0 0.0
        %1953 = vmatpush1.msra.mxu0 0.0
        %1954 = vmatprep.subr.mxu0 0.0
        %1955 = vmatpush1.msra.mxu0 0.0
        %1956 = vmatprep.subr.mxu0 0.0
        %1957 = vmatpush1.msra.mxu0 0.0
        %1958 = vmatprep.subr.mxu0 0.0
        %1959 = vmatpush1.msra.mxu0 0.0
        %1960 = vmatprep.mubr.f32.mxu0 0.0
        %1961 = vmatmul.mubr.f32.gmra.mrb[0].mxu0 %v1894
        %v1962 = vpop.f32.mrb[0].mxu0
        %v1963 = vadd.f32 %v1892, %v1962
        %v1964 = vpop.f32.mrb[0].mxu0
        %1965 = vdwg.mxu0
        %1966 = vst [vmem:[%s331 + $0x6] sm:$0x1] %v1963
        %v1967 = vsel %vm567, %v1963, -1e+30
        %v1968 = vsel %vm569, %v1967, -inf
        %1969 = vmax.xlane.f32.xlu0 %v1968
        %v1970 = vpop.xlane.xlu0 %1969
        %v1971 = vsub.f32 %v1967, %v1970
        %v1972 = vmul.f32 %v1971, 1.442695
        %v1973 = vpow.pop %v1972
        %v1974 = vsel %vm569, %v1973, 0.0
        %1975 = vadd.xlane.f32.xlu0 %v1974
        %v1976 = vpop.xlane.xlu0 %1975
        %v1977 = vrcp.pop %v1976
        %v1978 = vmul.f32 %v1973, %v1977
        %1979 = vst [vmem:[#allocation2 + $0x6] sm:$0x1] %v1978
        %s1980 = scalar_lea.vmem %s337, 224
        %v1981 = vld [vmem:[%s1980] sm:$0xff]
        %v1982 = vld [vmem:[%s1980 + $0x8] sm:$0xff]
        %v1983 = vld [vmem:[%s1980 + $0x10] sm:$0xff]
        %v1984 = vld [vmem:[%s1980 + $0x18] sm:$0xff]
        %v1985 = vld [vmem:[%s3] sm:$0xff]
        %v1986 = vld [vmem:[%s3 + $0x8] sm:$0xff]
        %v1987 = vld [vmem:[%s3 + $0x10] sm:$0xff]
        %v1988 = vld [vmem:[%s3 + $0x18] sm:$0xff]
        %v1989 = vld [vmem:[%s2] sm:$0xff]
        %v1990 = vld [vmem:[%s2 + $0x8] sm:$0xff]
        %v1991 = vld [vmem:[%s2 + $0x10] sm:$0xff]
        %v1992 = vld [vmem:[%s2 + $0x18] sm:$0xff]
        %v1994 = vsel %vm358, %v1985, 0
        %v1997 = vsel %vm358, %v1986, 0
        %v2000 = vsel %vm358, %v1987, 0
        %v2003 = vsel %vm358, %v1988, 0
        %2005 = vmatprep.subr.mxu0 0.0
        %2006 = vmatpush1.msra.mxu0 %v1981
        %2007 = vmatprep.subr.mxu0 0.0
        %2008 = vmatpush1.msra.mxu0 %v1982
        %2009 = vmatprep.subr.mxu0 0.0
        %2010 = vmatpush1.msra.mxu0 %v1983
        %2011 = vmatprep.subr.mxu0 0.0
        %2012 = vmatpush1.msra.mxu0 %v1984
        %2013 = vmatprep.subr.mxu0 0.0
        %2014 = vmatpush1.msra.mxu0 0.0
        %2015 = vmatprep.subr.mxu0 0.0
        %2016 = vmatpush1.msra.mxu0 0.0
        %2017 = vmatprep.subr.mxu0 0.0
        %2018 = vmatpush1.msra.mxu0 0.0
        %2019 = vmatprep.subr.mxu0 0.0
        %2020 = vmatpush1.msra.mxu0 0.0
        %2021 = vmatprep.subr.mxu0 0.0
        %2022 = vmatpush1.msra.mxu0 0.0
        %2023 = vmatprep.subr.mxu0 0.0
        %2024 = vmatpush1.msra.mxu0 0.0
        %2025 = vmatprep.subr.mxu0 0.0
        %2026 = vmatpush1.msra.mxu0 0.0
        %2027 = vmatprep.subr.mxu0 0.0
        %2028 = vmatpush1.msra.mxu0 0.0
        %2029 = vmatprep.subr.mxu0 0.0
        %2030 = vmatpush1.msra.mxu0 0.0
        %2031 = vmatprep.subr.mxu0 0.0
        %2032 = vmatpush1.msra.mxu0 0.0
        %2033 = vmatprep.subr.mxu0 0.0
        %2034 = vmatpush1.msra.mxu0 0.0
        %2035 = vmatprep.subr.mxu0 0.0
        %2036 = vmatpush1.msra.mxu0 0.0
        %2037 = vmatprep.subr.mxu0 0.0
        %2038 = vmatpush1.msra.mxu0 0.0
        %2039 = vmatprep.subr.mxu0 0.0
        %2040 = vmatpush1.msra.mxu0 0.0
        %2041 = vmatprep.subr.mxu0 0.0
        %2042 = vmatpush1.msra.mxu0 0.0
        %2043 = vmatprep.subr.mxu0 0.0
        %2044 = vmatpush1.msra.mxu0 0.0
        %2045 = vmatprep.subr.mxu0 0.0
        %2046 = vmatpush1.msra.mxu0 0.0
        %2047 = vmatprep.subr.mxu0 0.0
        %2048 = vmatpush1.msra.mxu0 0.0
        %2049 = vmatprep.subr.mxu0 0.0
        %2050 = vmatpush1.msra.mxu0 0.0
        %2051 = vmatprep.subr.mxu0 0.0
        %2052 = vmatpush1.msra.mxu0 0.0
        %2053 = vmatprep.subr.mxu0 0.0
        %2054 = vmatpush1.msra.mxu0 0.0
        %2055 = vmatprep.subr.mxu0 0.0
        %2056 = vmatpush1.msra.mxu0 0.0
        %2057 = vmatprep.subr.mxu0 0.0
        %2058 = vmatpush1.msra.mxu0 0.0
        %2059 = vmatprep.subr.mxu0 0.0
        %2060 = vmatpush1.msra.mxu0 0.0
        %2061 = vmatprep.subr.mxu0 0.0
        %2062 = vmatpush1.msra.mxu0 0.0
        %2063 = vmatprep.subr.mxu0 0.0
        %2064 = vmatpush1.msra.mxu0 0.0
        %2065 = vmatprep.subr.mxu0 0.0
        %2066 = vmatpush1.msra.mxu0 0.0
        %2067 = vmatprep.subr.mxu0 0.0
        %2068 = vmatpush1.msra.mxu0 0.0
        %2069 = vmatprep.mubr.f32.mxu0 0.0
        %2070 = vmatmul.mubr.f32.gmra.mrb[0].mxu0 %v1994
        %v2071 = vpop.f32.mrb[0].mxu0
        %v2072 = vadd.f32 %v1989, %v2071
        %v2073 = vpop.f32.mrb[0].mxu0
        %2074 = vmatprep.mubr.f32.mxu0 0.0
        %2075 = vmatmul.mubr.f32.gmra.mrb[0].mxu0 %v1997
        %v2076 = vpop.f32.mrb[0].mxu0
        %v2077 = vadd.f32 %v1990, %v2076
        %v2078 = vpop.f32.mrb[0].mxu0
        %2079 = vmatprep.mubr.f32.mxu0 0.0
        %2080 = vmatmul.mubr.f32.gmra.mrb[0].mxu0 %v2000
        %v2081 = vpop.f32.mrb[0].mxu0
        %v2082 = vadd.f32 %v1991, %v2081
        %v2083 = vpop.f32.mrb[0].mxu0
        %2084 = vmatprep.mubr.f32.mxu0 0.0
        %2085 = vmatmul.mubr.f32.gmra.mrb[0].mxu0 %v2003
        %v2086 = vpop.f32.mrb[0].mxu0
        %v2087 = vadd.f32 %v1992, %v2086
        %v2088 = vpop.f32.mrb[0].mxu0
        %2089 = vdwg.mxu0
        %s2090 = scalar_lea.vmem %s344, 224
        %v2091 = vld [vmem:[%s2090] sm:$0xff]
        %v2092 = vld [vmem:[%s2090 + $0x8] sm:$0xff]
        %v2093 = vld [vmem:[%s2090 + $0x10] sm:$0xff]
        %v2094 = vld [vmem:[%s2090 + $0x18] sm:$0xff]
        %2096 = vset.pattern.permute.xlu0 0
        %2097 = vperm.xlu0 %2096, %v2091
        %v2098 = vpop.permute.xlu0 %2097
        %2101 = vset.pattern.permute.xlu0 0
        %2102 = vperm.xlu0 %2101, %v2092
        %v2103 = vpop.permute.xlu0 %2102
        %2106 = vset.pattern.permute.xlu0 0
        %2107 = vperm.xlu0 %2106, %v2093
        %v2108 = vpop.permute.xlu0 %2107
        %2111 = vset.pattern.permute.xlu0 0
        %2112 = vperm.xlu0 %2111, %v2094
        %v2113 = vpop.permute.xlu0 %2112
        %v2115 = vadd.f32 %v2072, %v2098
        %v2116 = vadd.f32 %v2077, %v2103
        %v2117 = vadd.f32 %v2082, %v2108
        %v2118 = vadd.f32 %v2087, %v2113
        %v2119 = vmax.f32 %v2115, 0.0
        %v2120 = vmax.f32 %v2116, 0.0
        %v2121 = vmax.f32 %v2117, 0.0
        %v2122 = vmax.f32 %v2118, 0.0
        %v2123 = vld [vmem:[%s4] sm:$0x1]
        %s2124 = sld [smem:[#allocation3]]
        %v2125 = vstv %s2124
        %v2127 = vsel %vm358, %v2123, 0
        %2129 = vmatprep.subr.mxu0 0.0
        %2130 = vmatpush1.msra.mxu0 %v2119
        %2131 = vmatprep.subr.mxu0 0.0
        %2132 = vmatpush1.msra.mxu0 %v2120
        %2133 = vmatprep.subr.mxu0 0.0
        %2134 = vmatpush1.msra.mxu0 %v2121
        %2135 = vmatprep.subr.mxu0 0.0
        %2136 = vmatpush1.msra.mxu0 %v2122
        %2137 = vmatprep.subr.mxu0 0.0
        %2138 = vmatpush1.msra.mxu0 0.0
        %2139 = vmatprep.subr.mxu0 0.0
        %2140 = vmatpush1.msra.mxu0 0.0
        %2141 = vmatprep.subr.mxu0 0.0
        %2142 = vmatpush1.msra.mxu0 0.0
        %2143 = vmatprep.subr.mxu0 0.0
        %2144 = vmatpush1.msra.mxu0 0.0
        %2145 = vmatprep.subr.mxu0 0.0
        %2146 = vmatpush1.msra.mxu0 0.0
        %2147 = vmatprep.subr.mxu0 0.0
        %2148 = vmatpush1.msra.mxu0 0.0
        %2149 = vmatprep.subr.mxu0 0.0
        %2150 = vmatpush1.msra.mxu0 0.0
        %2151 = vmatprep.subr.mxu0 0.0
        %2152 = vmatpush1.msra.mxu0 0.0
        %2153 = vmatprep.subr.mxu0 0.0
        %2154 = vmatpush1.msra.mxu0 0.0
        %2155 = vmatprep.subr.mxu0 0.0
        %2156 = vmatpush1.msra.mxu0 0.0
        %2157 = vmatprep.subr.mxu0 0.0
        %2158 = vmatpush1.msra.mxu0 0.0
        %2159 = vmatprep.subr.mxu0 0.0
        %2160 = vmatpush1.msra.mxu0 0.0
        %2161 = vmatprep.subr.mxu0 0.0
        %2162 = vmatpush1.msra.mxu0 0.0
        %2163 = vmatprep.subr.mxu0 0.0
        %2164 = vmatpush1.msra.mxu0 0.0
        %2165 = vmatprep.subr.mxu0 0.0
        %2166 = vmatpush1.msra.mxu0 0.0
        %2167 = vmatprep.subr.mxu0 0.0
        %2168 = vmatpush1.msra.mxu0 0.0
        %2169 = vmatprep.subr.mxu0 0.0
        %2170 = vmatpush1.msra.mxu0 0.0
        %2171 = vmatprep.subr.mxu0 0.0
        %2172 = vmatpush1.msra.mxu0 0.0
        %2173 = vmatprep.subr.mxu0 0.0
        %2174 = vmatpush1.msra.mxu0 0.0
        %2175 = vmatprep.subr.mxu0 0.0
        %2176 = vmatpush1.msra.mxu0 0.0
        %2177 = vmatprep.subr.mxu0 0.0
        %2178 = vmatpush1.msra.mxu0 0.0
        %2179 = vmatprep.subr.mxu0 0.0
        %2180 = vmatpush1.msra.mxu0 0.0
        %2181 = vmatprep.subr.mxu0 0.0
        %2182 = vmatpush1.msra.mxu0 0.0
        %2183 = vmatprep.subr.mxu0 0.0
        %2184 = vmatpush1.msra.mxu0 0.0
        %2185 = vmatprep.subr.mxu0 0.0
        %2186 = vmatpush1.msra.mxu0 0.0
        %2187 = vmatprep.subr.mxu0 0.0
        %2188 = vmatpush1.msra.mxu0 0.0
        %2189 = vmatprep.subr.mxu0 0.0
        %2190 = vmatpush1.msra.mxu0 0.0
        %2191 = vmatprep.subr.mxu0 0.0
        %2192 = vmatpush1.msra.mxu0 0.0
        %2193 = vmatprep.mubr.f32.mxu0 0.0
        %2194 = vmatmul.mubr.f32.gmra.mrb[0].mxu0 %v2127
        %v2195 = vpop.f32.mrb[0].mxu0
        %v2196 = vadd.f32 %v2125, %v2195
        %v2197 = vpop.f32.mrb[0].mxu0
        %2198 = vdwg.mxu0
        %2199 = vst [vmem:[%s331 + $0x7] sm:$0x1] %v2196
        %v2200 = vsel %vm567, %v2196, -1e+30
        %v2201 = vsel %vm569, %v2200, -inf
        %2202 = vmax.xlane.f32.xlu0 %v2201
        %v2203 = vpop.xlane.xlu0 %2202
        %v2204 = vsub.f32 %v2200, %v2203
        %v2205 = vmul.f32 %v2204, 1.442695
        %v2206 = vpow.pop %v2205
        %v2207 = vsel %vm569, %v2206, 0.0
        %2208 = vadd.xlane.f32.xlu0 %v2207
        %v2209 = vpop.xlane.xlu0 %2208
        %v2210 = vrcp.pop %v2209
        %v2211 = vmul.f32 %v2206, %v2210
        %2212 = vst [vmem:[#allocation2 + $0x7] sm:$0x1] %v2211
        %v2213 = vld [vmem:[#allocation2] sm:$0xff]
        %v2214 = vld [vmem:[%s6] sm:$0xff]
        %v2215 = vld [vmem:[%s6 + $0x8] sm:$0xff]
        %v2216 = vld [vmem:[%s6 + $0x10] sm:$0xff]
        %v2217 = vld [vmem:[%s6 + $0x18] sm:$0xff]
        %v2218 = vld [vmem:[%s6 + $0x20] sm:$0xff]
        %v2219 = vld [vmem:[%s6 + $0x28] sm:$0xff]
        %v2220 = vld [vmem:[%s6 + $0x30] sm:$0xff]
        %v2221 = vld [vmem:[%s6 + $0x38] sm:$0xff]
        %v2222 = vld [vmem:[%s6 + $0x40] sm:$0xff]
        %v2223 = vld [vmem:[%s6 + $0x48] sm:$0xff]
        %v2224 = vld [vmem:[%s6 + $0x50] sm:$0xff]
        %v2225 = vld [vmem:[%s6 + $0x58] sm:$0xff]
        %v2226 = vld [vmem:[%s6 + $0x60] sm:$0xff]
        %v2227 = vld [vmem:[%s6 + $0x68] sm:$0xff]
        %v2228 = vld [vmem:[%s6 + $0x70] sm:$0xff]
        %v2229 = vld [vmem:[%s6 + $0x78] sm:$0xff]
        %2230 = vmatprep.subr.mxu0 0.0
        %2231 = vmatpush1.msra.mxu0 %v2214
        %2232 = vmatprep.subr.mxu0 0.0
        %2233 = vmatpush1.msra.mxu0 %v2215
        %2234 = vmatprep.subr.mxu0 0.0
        %2235 = vmatpush1.msra.mxu0 %v2216
        %2236 = vmatprep.subr.mxu0 0.0
        %2237 = vmatpush1.msra.mxu0 %v2217
        %2238 = vmatprep.subr.mxu0 0.0
        %2239 = vmatpush1.msra.mxu0 %v2218
        %2240 = vmatprep.subr.mxu0 0.0
        %2241 = vmatpush1.msra.mxu0 %v2219
        %2242 = vmatprep.subr.mxu0 0.0
        %2243 = vmatpush1.msra.mxu0 %v2220
        %2244 = vmatprep.subr.mxu0 0.0
        %2245 = vmatpush1.msra.mxu0 %v2221
        %2246 = vmatprep.subr.mxu0 0.0
        %2247 = vmatpush1.msra.mxu0 %v2222
        %2248 = vmatprep.subr.mxu0 0.0
        %2249 = vmatpush1.msra.mxu0 %v2223
        %2250 = vmatprep.subr.mxu0 0.0
        %2251 = vmatpush1.msra.mxu0 %v2224
        %2252 = vmatprep.subr.mxu0 0.0
        %2253 = vmatpush1.msra.mxu0 %v2225
        %2254 = vmatprep.subr.mxu0 0.0
        %2255 = vmatpush1.msra.mxu0 %v2226
        %2256 = vmatprep.subr.mxu0 0.0
        %2257 = vmatpush1.msra.mxu0 %v2227
        %2258 = vmatprep.subr.mxu0 0.0
        %2259 = vmatpush1.msra.mxu0 %v2228
        %2260 = vmatprep.subr.mxu0 0.0
        %2261 = vmatpush1.msra.mxu0 %v2229
        %2262 = vmatprep.subr.mxu0 0.0
        %2263 = vmatpush1.msra.mxu0 0.0
        %2264 = vmatprep.subr.mxu0 0.0
        %2265 = vmatpush1.msra.mxu0 0.0
        %2266 = vmatprep.subr.mxu0 0.0
        %2267 = vmatpush1.msra.mxu0 0.0
        %2268 = vmatprep.subr.mxu0 0.0
        %2269 = vmatpush1.msra.mxu0 0.0
        %2270 = vmatprep.subr.mxu0 0.0
        %2271 = vmatpush1.msra.mxu0 0.0
        %2272 = vmatprep.subr.mxu0 0.0
        %2273 = vmatpush1.msra.mxu0 0.0
        %2274 = vmatprep.subr.mxu0 0.0
        %2275 = vmatpush1.msra.mxu0 0.0
        %2276 = vmatprep.subr.mxu0 0.0
        %2277 = vmatpush1.msra.mxu0 0.0
        %2278 = vmatprep.subr.mxu0 0.0
        %2279 = vmatpush1.msra.mxu0 0.0
        %2280 = vmatprep.subr.mxu0 0.0
        %2281 = vmatpush1.msra.mxu0 0.0
        %2282 = vmatprep.subr.mxu0 0.0
        %2283 = vmatpush1.msra.mxu0 0.0
        %2284 = vmatprep.subr.mxu0 0.0
        %2285 = vmatpush1.msra.mxu0 0.0
        %2286 = vmatprep.subr.mxu0 0.0
        %2287 = vmatpush1.msra.mxu0 0.0
        %2288 = vmatprep.subr.mxu0 0.0
        %2289 = vmatpush1.msra.mxu0 0.0
        %2290 = vmatprep.subr.mxu0 0.0
        %2291 = vmatpush1.msra.mxu0 0.0
        %2292 = vmatprep.subr.mxu0 0.0
        %2293 = vmatpush1.msra.mxu0 0.0
        %2294 = vmatprep.mubr.f32.mxu0 0.0
        %2295 = vmatmul.mubr.f32.gmra.mrb[0].mxu0 %v2213
        %v2296 = vpop.f32.mrb[0].mxu0
        %v2297 = vadd.f32 0.0, %v2296
        %v2298 = vpop.f32.mrb[0].mxu0
        %2299 = vdwg.mxu0
        %2300 = vst.msk [vmem:[%s324] sm:$0xff] %vm358, %v2297
        %s2301 = sand.u32 %s192, 1
        %s2302 = scalar_lea.sflag [#allocation5], %s2301
        %s2303 = sand.u32 %s192, 1
        %s2304 = smul.addr %s2303, 8
        %s2305 = scalar_lea.vmem [#allocation4], %s2304
        %s2306 = sand.u32 %s218, 1
        %s2307 = scalar_lea.sflag [#allocation7], %s2306
        %s2308 = sand.u32 %s218, 1
        %s2309 = smul.addr %s2308, 8
        %s2310 = scalar_lea.vmem [#allocation6], %s2309
        // Predicated region
        $region49: #{_run.1} parent=47 // pred_check
          %p2311 = pneg %p202
        $region50: #{_run.1} parent=47 // pred_check_branch
          %2313 = sbr.rel (%p2311) target = $region52
        $region51: #{_run.1} parent=47 // pred_region
          %s2315 = ssub.s32 128, 128
          %2316 = vsyncadd %s2302, %s2315
          %s2317 = smul.addr %s27, 128
          %s2318 = scalar_lea.hbm %s7, %s2317
          %s2320 = sshll.u32 %s2305, 4
          %s2321 = int_to_ptr.vmem [resolvable:$true] %s2320
          %2323 = dma.vmem_to_hbm [thread:$0]  %s2321, 128, %s2318, %s2302
        $region52: #{_run.1} parent=47 // pred_fallthru
          _
        // Predicated region
        $region53: #{_run.1} parent=47 // pred_check
          %p2324 = pneg %p228
        $region54: #{_run.1} parent=47 // pred_check_branch
          %2326 = sbr.rel (%p2324) target = $region56
        $region55: #{_run.1} parent=47 // pred_region
          %s2328 = ssub.s32 128, 128
          %2329 = vsyncadd %s2307, %s2328
          %s2330 = smul.addr %s27, 128
          %s2331 = scalar_lea.hbm %s8, %s2330
          %s2333 = sshll.u32 %s2310, 4
          %s2334 = int_to_ptr.vmem [resolvable:$true] %s2333
          %2336 = dma.vmem_to_hbm [thread:$0]  %s2334, 128, %s2331, %s2307
        $region56: #{_run.1} parent=47 // pred_fallthru
          _
      $region48: #{_run.1} parent=5 // pred_fallthru
        _
      %p2337 = scmp.le.s32.totalorder 2, %s22
      // Predicated region
      $region57: #{_run.1} parent=5 // pred_check
        %p2338 = pneg %p2337
      $region58: #{_run.1} parent=5 // pred_check_branch
        %2340 = sbr.rel (%p2338) target = $region60
      $region59: #{_run.1} parent=5 // pred_region
        %s2341 = ssub.s32 %s22, 2
        // Predicated region
        $region61: #{_run.1} parent=59 // pred_check
          %p2342 = pneg %p208
        $region62: #{_run.1} parent=59 // pred_check_branch
          %2344 = sbr.rel (%p2342) target = $region64
        $region63: #{_run.1} parent=59 // pred_region
          %s2345 = sand.u32 %s193, 1
          %s2346 = scalar_lea.sflag [#allocation5], %s2345
          %s2347 = sand.u32 %s193, 1
          %s2348 = smul.addr %s2347, 8
          %s2349 = scalar_lea.vmem [#allocation4], %s2348
          %2350 = dma.done %s2346, 128
        $region64: #{_run.1} parent=59 // pred_fallthru
          _
        // Predicated region
        $region65: #{_run.1} parent=59 // pred_check
          %p2351 = pneg %p234
        $region66: #{_run.1} parent=59 // pred_check_branch
          %2353 = sbr.rel (%p2351) target = $region68
        $region67: #{_run.1} parent=59 // pred_region
          %s2354 = sand.u32 %s219, 1
          %s2355 = scalar_lea.sflag [#allocation7], %s2354
          %s2356 = sand.u32 %s219, 1
          %s2357 = smul.addr %s2356, 8
          %s2358 = scalar_lea.vmem [#allocation6], %s2357
          %2359 = dma.done %s2355, 128
        $region68: #{_run.1} parent=59 // pred_fallthru
          _
      $region60: #{_run.1} parent=5 // pred_fallthru
        _
    $region6: #{_run.1} parent=1 // loop_footer
      %s26 = sadd.s32 1, %s22
    $region7: #{_run.1} parent=1 // loop_footer_branch
      %21 = sbr.rel target = $region3
    $region8: #{_run.1} parent=1 // loop_exit
      _
    %2360 = vsyncpa [#allocation5], 1
    %s2361 = scalar_lea.sflag [#allocation5], 1
    %2362 = vsyncpa %s2361, 1
    %2363 = vsyncpa [#allocation7], 1
    %s2364 = scalar_lea.sflag [#allocation7], 1
    %2365 = vsyncpa %s2364, 1

</llo_original>
